<compile_context>
chip_gen: v7x
topology: tpu7x:2x2x1
jax: 0.10.0
libtpu: 0.0.40
codegen_flags: <defaults>
</compile_context>

<pallas_src>
import math
import jax
import jax.numpy as jnp
from jax.experimental import pallas as pl
from jax.experimental.pallas import tpu as pltpu

# ---- static configuration (small, consistent with the module's __init__) ----
BATCH = 2
SEQ = 8
IN_FEATURES = 32
OUT_FEATURES = 64
PWFF_INNER = 128
NUM_HEADS = 4
LN_EPS = 1e-5


def scaling_layer_kernel(
    x_ref,                        # (S, Din)
    wqkv_ref, bqkv_ref,           # (Din, 3*Din), (1, 3*Din)   fused q|k|v
    wo_ref, bo_ref,               # (Din, Din),   (1, Din)
    ln1w_ref, ln1b_ref,           # (1, Din)
    wfr_ref, bfr_ref,             # (Din, inner+Dout), (1, inner+Dout)  fused W1|Wr
    w2_ref, b2_ref,               # (inner, Dout), (1, Dout)
    ln2w_ref, ln2b_ref,           # (1, Dout)
    o_ref,                        # (S, Dout)
):
    x = x_ref[...].astype(jnp.float32)            # (S, Din)
    s_len, d_in = x.shape
    d_head = d_in // NUM_HEADS
    inv_sqrt_dh = 1.0 / math.sqrt(d_head)

    # ---------------- MultiHeadSelfAttn (fused QKV, Wo-row accumulation) ------
    qkv = jnp.dot(x, wqkv_ref[...],
                  preferred_element_type=jnp.float32) + bqkv_ref[...]   # (S, 3*Din)

    mha = jnp.zeros((s_len, d_in), jnp.float32)
    for h in range(NUM_HEADS):                    # static unrolled loop over heads
        lo = h * d_head
        qh = qkv[:, lo:lo + d_head]
        kh = qkv[:, d_in + lo:d_in + lo + d_head]
        vh = qkv[:, 2 * d_in + lo:2 * d_in + lo + d_head]
        scores = jnp.dot(qh, kh.T, preferred_element_type=jnp.float32) * inv_sqrt_dh
        scores = scores - jnp.max(scores, axis=-1, keepdims=True)
        p = jnp.exp(scores)
        p = p * pl.reciprocal(jnp.sum(p, axis=-1, keepdims=True), approx=True)
        ctx_h = jnp.dot(p, vh, preferred_element_type=jnp.float32)       # (S, dh)
        # sublane slice of Wo (rows h*dh:(h+1)*dh) -> accumulate, no concat needed
        mha = mha + jnp.dot(ctx_h, wo_ref[lo:lo + d_head, :],
                            preferred_element_type=jnp.float32)
    mha_out = mha + bo_ref[...]                                          # (S, Din)

    # ---------------- residual + multihead_ln (over Din) ----------------------
    h1 = mha_out + x
    mu1 = jnp.mean(h1, axis=-1, keepdims=True)
    var1 = jnp.mean((h1 - mu1) * (h1 - mu1), axis=-1, keepdims=True)
    h1 = (h1 - mu1) * jax.lax.rsqrt(var1 + LN_EPS)
    h1 = h1 * ln1w_ref[...] + ln1b_ref[...]                              # (S, Din)

    # ---------------- fused FFN-in | residual_scale ----------------------------
    fr = jnp.dot(h1, wfr_ref[...],
                 preferred_element_type=jnp.float32) + bfr_ref[...]      # (S, inner+Dout)
    ff = jnp.maximum(fr[:, :PWFF_INNER], 0.0)                            # ReLU (FFN-in)
    res = fr[:, PWFF_INNER:]                                             # residual_scale
    ff = jnp.dot(ff, w2_ref[...],
                 preferred_element_type=jnp.float32) + b2_ref[...]       # (S, Dout)

    # ---------------- residual + pwff_ln (over Dout) --------------------------
    h2 = ff + res
    mu2 = jnp.mean(h2, axis=-1, keepdims=True)
    var2 = jnp.mean((h2 - mu2) * (h2 - mu2), axis=-1, keepdims=True)
    h2 = (h2 - mu2) * jax.lax.rsqrt(var2 + LN_EPS)
    h2 = h2 * ln2w_ref[...] + ln2b_ref[...]

    # Dout=64 (<128 lanes) -> masked vst; negligible at this size.
    o_ref[...] = h2.astype(o_ref.dtype)


def scaling_layer_forward(x, params):
    """x: (B, S, IN_FEATURES) float32 -> (B, S, OUT_FEATURES) float32."""
    (wq, bq, wk, bk, wv, bv, wo, bo, ln1w, ln1b,
     w1, b1, w2, b2, wr, br, ln2w, ln2b) = params

    B, S, Din = x.shape
    Dout = OUT_FEATURES
    inner = PWFF_INNER

    # Host-side weight fusion (exact: pure concatenation).
    wqkv = jnp.concatenate([wq, wk, wv], axis=1)        # (Din, 3*Din)
    bqkv = jnp.concatenate([bq, bk, bv], axis=1)        # (1, 3*Din)
    wfr = jnp.concatenate([w1, wr], axis=1)             # (Din, inner+Dout)
    bfr = jnp.concatenate([b1, br], axis=1)             # (1, inner+Dout)

    full = lambda shape: pl.BlockSpec(shape, lambda b: (0,) * len(shape))

    in_specs = [
        pl.BlockSpec((None, S, Din), lambda b: (b, 0, 0)),   # x, batch-squeezed
        full((Din, 3 * Din)), full((1, 3 * Din)),            # fused Wq|Wk|Wv
        full((Din, Din)), full((1, Din)),                    # Wo, bo
        full((1, Din)), full((1, Din)),                      # ln1 w, b
        full((Din, inner + Dout)), full((1, inner + Dout)),  # fused W1|Wr
        full((inner, Dout)), full((1, Dout)),                # pwff W2, b2
        full((1, Dout)), full((1, Dout)),                    # ln2 w, b
    ]
    out_spec = pl.BlockSpec((None, S, Dout), lambda b: (b, 0, 0))

    fn = pl.pallas_call(
        scaling_layer_kernel,
        out_shape=jax.ShapeDtypeStruct((B, S, Dout), jnp.float32),
        grid_spec=pltpu.PrefetchScalarGridSpec(
            num_scalar_prefetch=0,
            grid=(B,),
            in_specs=in_specs,
            out_specs=out_spec,
        ),
        compiler_params=pltpu.CompilerParams(
            dimension_semantics=("parallel",),   # v7x: one batch element per TC
        ),
    )
    return fn(x, wqkv, bqkv, wo, bo, ln1w, ln1b, wfr, bfr, w2, b2, ln2w, ln2b)


def init_params(key):
    """Deterministic synthetic parameters (weights stored as (in, out))."""
    ks = jax.random.split(key, 20)

    def lin(k, fan_in, fan_out):
        bound = 1.0 / math.sqrt(fan_in)
        w = jax.random.uniform(k, (fan_in, fan_out), jnp.float32, -bound, bound)
        b = jax.random.uniform(jax.random.fold_in(k, 1), (1, fan_out),
                               jnp.float32, -bound, bound)
        return w, b

    Din, Dout, inner = IN_FEATURES, OUT_FEATURES, PWFF_INNER
    wq, bq = lin(ks[0], Din, Din)
    wk, bk = lin(ks[1], Din, Din)
    wv, bv = lin(ks[2], Din, Din)
    wo, bo = lin(ks[3], Din, Din)
    ln1w = jnp.ones((1, Din), jnp.float32)
    ln1b = jnp.zeros((1, Din), jnp.float32)
    w1, b1 = lin(ks[4], Din, inner)
    w2, b2 = lin(ks[5], inner, Dout)
    wr, br = lin(ks[6], Din, Dout)
    ln2w = jnp.ones((1, Dout), jnp.float32)
    ln2b = jnp.zeros((1, Dout), jnp.float32)
    return (wq, bq, wk, bk, wv, bv, wo, bo, ln1w, ln1b,
            w1, b1, w2, b2, wr, br, ln2w, ln2b)


def reference_forward(x, params):
    """Plain-JAX reference with identical math (unfused weights)."""
    (wq, bq, wk, bk, wv, bv, wo, bo, ln1w, ln1b,
     w1, b1, w2, b2, wr, br, ln2w, ln2b) = params
    B, S, Din = x.shape
    dh = Din // NUM_HEADS

    def ln(h, w, b):
        mu = jnp.mean(h, -1, keepdims=True)
        var = jnp.mean((h - mu) ** 2, -1, keepdims=True)
        return (h - mu) / jnp.sqrt(var + LN_EPS) * w + b

    q = x @ wq + bq
    k = x @ wk + bk
    v = x @ wv + bv
    q = q.reshape(B, S, NUM_HEADS, dh).transpose(0, 2, 1, 3)
    k = k.reshape(B, S, NUM_HEADS, dh).transpose(0, 2, 1, 3)
    v = v.reshape(B, S, NUM_HEADS, dh).transpose(0, 2, 1, 3)
    p = jax.nn.softmax(q @ k.transpose(0, 1, 3, 2) / math.sqrt(dh), axis=-1)
    ctx = (p @ v).transpose(0, 2, 1, 3).reshape(B, S, Din)
    out = ctx @ wo + bo
    h1 = ln(out + x, ln1w, ln1b)
    ff = jnp.maximum(h1 @ w1 + b1, 0.0) @ w2 + b2
    res = h1 @ wr + br
    return ln(ff + res, ln2w, ln2b)


if __name__ == "__main__":
    key = jax.random.PRNGKey(0)
    k_x, k_p = jax.random.split(key)
    x = jax.random.normal(k_x, (BATCH, SEQ, IN_FEATURES), jnp.float32)
    params = init_params(k_p)

    out = scaling_layer_forward(x, params)
    out = jax.block_until_ready(out)

    ref = reference_forward(x, params)
    assert out.shape == (BATCH, SEQ, OUT_FEATURES), out.shape
    # Tolerance slightly relaxed vs 1e-4 because the softmax denominator uses the
    # EUP approximate reciprocal (pl.reciprocal(..., approx=True)).
    assert jnp.allclose(out, ref, atol=2e-3, rtol=2e-3), \
        float(jnp.max(jnp.abs(out - ref)))

    print("KERNEL_OK")
</pallas_src>

<mosaic_0001>
module attributes {stable_mosaic.version = 11 : i64} {
  func.func @scaling_layer_kernel(%arg0: i32, %arg1: memref<1x8x32xf32, #tpu.memory_space<vmem>>, %arg2: memref<32x96xf32, #tpu.memory_space<vmem>>, %arg3: memref<1x96xf32, #tpu.memory_space<vmem>>, %arg4: memref<32x32xf32, #tpu.memory_space<vmem>>, %arg5: memref<1x32xf32, #tpu.memory_space<vmem>>, %arg6: memref<1x32xf32, #tpu.memory_space<vmem>>, %arg7: memref<1x32xf32, #tpu.memory_space<vmem>>, %arg8: memref<32x192xf32, #tpu.memory_space<vmem>>, %arg9: memref<1x192xf32, #tpu.memory_space<vmem>>, %arg10: memref<128x64xf32, #tpu.memory_space<vmem>>, %arg11: memref<1x64xf32, #tpu.memory_space<vmem>>, %arg12: memref<1x64xf32, #tpu.memory_space<vmem>>, %arg13: memref<1x64xf32, #tpu.memory_space<vmem>>, %arg14: memref<1x8x64xf32, #tpu.memory_space<vmem>>) attributes {dimension_semantics = [#tpu.dimension_semantics<parallel>], iteration_bounds = array<i64: 2>, scalar_prefetch = 0 : i64, scratch_operands = 0 : i64, tpu.core_type = #tpu.core_type<tc>, window_params = [{transform_indices = @transform_0, window_bounds = array<i64: 1, 8, 32>}, {pipeline_mode = #tpu.pipeline_mode<synchronous>, transform_indices = @transform_1, window_bounds = array<i64: 32, 96>}, {pipeline_mode = #tpu.pipeline_mode<synchronous>, transform_indices = @transform_2, window_bounds = array<i64: 1, 96>}, {pipeline_mode = #tpu.pipeline_mode<synchronous>, transform_indices = @transform_3, window_bounds = array<i64: 32, 32>}, {pipeline_mode = #tpu.pipeline_mode<synchronous>, transform_indices = @transform_4, window_bounds = array<i64: 1, 32>}, {pipeline_mode = #tpu.pipeline_mode<synchronous>, transform_indices = @transform_5, window_bounds = array<i64: 1, 32>}, {pipeline_mode = #tpu.pipeline_mode<synchronous>, transform_indices = @transform_6, window_bounds = array<i64: 1, 32>}, {pipeline_mode = #tpu.pipeline_mode<synchronous>, transform_indices = @transform_7, window_bounds = array<i64: 32, 192>}, {pipeline_mode = #tpu.pipeline_mode<synchronous>, transform_indices = @transform_8, window_bounds = array<i64: 1, 192>}, {pipeline_mode = #tpu.pipeline_mode<synchronous>, transform_indices = @transform_9, window_bounds = array<i64: 128, 64>}, {pipeline_mode = #tpu.pipeline_mode<synchronous>, transform_indices = @transform_10, window_bounds = array<i64: 1, 64>}, {pipeline_mode = #tpu.pipeline_mode<synchronous>, transform_indices = @transform_11, window_bounds = array<i64: 1, 64>}, {pipeline_mode = #tpu.pipeline_mode<synchronous>, transform_indices = @transform_12, window_bounds = array<i64: 1, 64>}, {transform_indices = @transform_13, window_bounds = array<i64: 1, 8, 64>}]} {
    %c0 = arith.constant 0 : index
    %c0_0 = arith.constant 0 : index
    %c0_1 = arith.constant 0 : index
    %0 = vector.load %arg1[%c0, %c0_0, %c0_1] : memref<1x8x32xf32, #tpu.memory_space<vmem>>, vector<1x8x32xf32>
    %1 = vector.shape_cast %0 : vector<1x8x32xf32> to vector<8x32xf32>
    %c0_2 = arith.constant 0 : index
    %c0_3 = arith.constant 0 : index
    %2 = vector.load %arg2[%c0_2, %c0_3] : memref<32x96xf32, #tpu.memory_space<vmem>>, vector<32x96xf32>
    %cst = arith.constant dense<0.000000e+00> : vector<8x96xf32>
    %3 = tpu.matmul %1, %2, %cst {dimension_numbers = #tpu.dot_dimension_numbers<[1], [0], [0], [1], [0, 0, 1, 1], [], []>} : vector<8x32xf32>, vector<32x96xf32>, vector<8x96xf32> -> vector<8x96xf32>
    %c0_4 = arith.constant 0 : index
    %c0_5 = arith.constant 0 : index
    %4 = vector.load %arg3[%c0_4, %c0_5] : memref<1x96xf32, #tpu.memory_space<vmem>>, vector<1x96xf32>
    %5 = vector.broadcast %4 : vector<1x96xf32> to vector<8x96xf32>
    %6 = arith.addf %3, %5 : vector<8x96xf32>
    %cst_6 = arith.constant 0.000000e+00 : f32
    %7 = vector.broadcast %cst_6 : f32 to vector<8x32xf32>
    %8 = vector.extract_strided_slice %6 {offsets = [0, 0], sizes = [8, 8], strides = [1, 1]} : vector<8x96xf32> to vector<8x8xf32>
    %9 = vector.extract_strided_slice %6 {offsets = [0, 32], sizes = [8, 8], strides = [1, 1]} : vector<8x96xf32> to vector<8x8xf32>
    %10 = vector.extract_strided_slice %6 {offsets = [0, 64], sizes = [8, 8], strides = [1, 1]} : vector<8x96xf32> to vector<8x8xf32>
    %11 = tpu.transpose %9, [1, 0] : vector<8x8xf32> -> vector<8x8xf32>
    %cst_7 = arith.constant dense<0.000000e+00> : vector<8x8xf32>
    %12 = tpu.matmul %8, %11, %cst_7 {dimension_numbers = #tpu.dot_dimension_numbers<[1], [0], [0], [1], [0, 0, 1, 1], [], []>} : vector<8x8xf32>, vector<8x8xf32>, vector<8x8xf32> -> vector<8x8xf32>
    %cst_8 = arith.constant 0.353553385 : f32
    %13 = vector.broadcast %cst_8 : f32 to vector<8x8xf32>
    %14 = arith.mulf %12, %13 : vector<8x8xf32>
    %cst_9 = arith.constant dense<0xFF800000> : vector<8xf32>
    %15 = vector.multi_reduction <maximumf>, %14, %cst_9 [1] : vector<8x8xf32> to vector<8xf32>
    %16 = vector.shape_cast %15 : vector<8xf32> to vector<8x1xf32>
    %17 = vector.broadcast %16 : vector<8x1xf32> to vector<8x8xf32>
    %18 = arith.subf %14, %17 : vector<8x8xf32>
    %19 = math.exp %18 : vector<8x8xf32>
    %cst_10 = arith.constant dense<0.000000e+00> : vector<8xf32>
    %20 = vector.multi_reduction <add>, %19, %cst_10 [1] : vector<8x8xf32> to vector<8xf32>
    %21 = vector.shape_cast %20 : vector<8xf32> to vector<8x1xf32>
    %22 = tpu.reciprocal %21 {approx = true} : vector<8x1xf32> -> vector<8x1xf32>
    %23 = vector.broadcast %22 : vector<8x1xf32> to vector<8x8xf32>
    %24 = arith.mulf %19, %23 : vector<8x8xf32>
    %cst_11 = arith.constant dense<0.000000e+00> : vector<8x8xf32>
    %25 = tpu.matmul %24, %10, %cst_11 {dimension_numbers = #tpu.dot_dimension_numbers<[1], [0], [0], [1], [0, 0, 1, 1], [], []>} : vector<8x8xf32>, vector<8x8xf32>, vector<8x8xf32> -> vector<8x8xf32>
    %c0_12 = arith.constant 0 : index
    %c0_13 = arith.constant 0 : index
    %26 = vector.load %arg4[%c0_12, %c0_13] : memref<32x32xf32, #tpu.memory_space<vmem>>, vector<8x32xf32>
    %cst_14 = arith.constant dense<0.000000e+00> : vector<8x32xf32>
    %27 = tpu.matmul %25, %26, %cst_14 {dimension_numbers = #tpu.dot_dimension_numbers<[1], [0], [0], [1], [0, 0, 1, 1], [], []>} : vector<8x8xf32>, vector<8x32xf32>, vector<8x32xf32> -> vector<8x32xf32>
    %28 = arith.addf %7, %27 : vector<8x32xf32>
    %29 = vector.extract_strided_slice %6 {offsets = [0, 8], sizes = [8, 8], strides = [1, 1]} : vector<8x96xf32> to vector<8x8xf32>
    %30 = vector.extract_strided_slice %6 {offsets = [0, 40], sizes = [8, 8], strides = [1, 1]} : vector<8x96xf32> to vector<8x8xf32>
    %31 = vector.extract_strided_slice %6 {offsets = [0, 72], sizes = [8, 8], strides = [1, 1]} : vector<8x96xf32> to vector<8x8xf32>
    %32 = tpu.transpose %30, [1, 0] : vector<8x8xf32> -> vector<8x8xf32>
    %cst_15 = arith.constant dense<0.000000e+00> : vector<8x8xf32>
    %33 = tpu.matmul %29, %32, %cst_15 {dimension_numbers = #tpu.dot_dimension_numbers<[1], [0], [0], [1], [0, 0, 1, 1], [], []>} : vector<8x8xf32>, vector<8x8xf32>, vector<8x8xf32> -> vector<8x8xf32>
    %cst_16 = arith.constant 0.353553385 : f32
    %34 = vector.broadcast %cst_16 : f32 to vector<8x8xf32>
    %35 = arith.mulf %33, %34 : vector<8x8xf32>
    %cst_17 = arith.constant dense<0xFF800000> : vector<8xf32>
    %36 = vector.multi_reduction <maximumf>, %35, %cst_17 [1] : vector<8x8xf32> to vector<8xf32>
    %37 = vector.shape_cast %36 : vector<8xf32> to vector<8x1xf32>
    %38 = vector.broadcast %37 : vector<8x1xf32> to vector<8x8xf32>
    %39 = arith.subf %35, %38 : vector<8x8xf32>
    %40 = math.exp %39 : vector<8x8xf32>
    %cst_18 = arith.constant dense<0.000000e+00> : vector<8xf32>
    %41 = vector.multi_reduction <add>, %40, %cst_18 [1] : vector<8x8xf32> to vector<8xf32>
    %42 = vector.shape_cast %41 : vector<8xf32> to vector<8x1xf32>
    %43 = tpu.reciprocal %42 {approx = true} : vector<8x1xf32> -> vector<8x1xf32>
    %44 = vector.broadcast %43 : vector<8x1xf32> to vector<8x8xf32>
    %45 = arith.mulf %40, %44 : vector<8x8xf32>
    %cst_19 = arith.constant dense<0.000000e+00> : vector<8x8xf32>
    %46 = tpu.matmul %45, %31, %cst_19 {dimension_numbers = #tpu.dot_dimension_numbers<[1], [0], [0], [1], [0, 0, 1, 1], [], []>} : vector<8x8xf32>, vector<8x8xf32>, vector<8x8xf32> -> vector<8x8xf32>
    %c8 = arith.constant 8 : index
    %c0_20 = arith.constant 0 : index
    %47 = vector.load %arg4[%c8, %c0_20] : memref<32x32xf32, #tpu.memory_space<vmem>>, vector<8x32xf32>
    %cst_21 = arith.constant dense<0.000000e+00> : vector<8x32xf32>
    %48 = tpu.matmul %46, %47, %cst_21 {dimension_numbers = #tpu.dot_dimension_numbers<[1], [0], [0], [1], [0, 0, 1, 1], [], []>} : vector<8x8xf32>, vector<8x32xf32>, vector<8x32xf32> -> vector<8x32xf32>
    %49 = arith.addf %28, %48 : vector<8x32xf32>
    %50 = vector.extract_strided_slice %6 {offsets = [0, 16], sizes = [8, 8], strides = [1, 1]} : vector<8x96xf32> to vector<8x8xf32>
    %51 = vector.extract_strided_slice %6 {offsets = [0, 48], sizes = [8, 8], strides = [1, 1]} : vector<8x96xf32> to vector<8x8xf32>
    %52 = vector.extract_strided_slice %6 {offsets = [0, 80], sizes = [8, 8], strides = [1, 1]} : vector<8x96xf32> to vector<8x8xf32>
    %53 = tpu.transpose %51, [1, 0] : vector<8x8xf32> -> vector<8x8xf32>
    %cst_22 = arith.constant dense<0.000000e+00> : vector<8x8xf32>
    %54 = tpu.matmul %50, %53, %cst_22 {dimension_numbers = #tpu.dot_dimension_numbers<[1], [0], [0], [1], [0, 0, 1, 1], [], []>} : vector<8x8xf32>, vector<8x8xf32>, vector<8x8xf32> -> vector<8x8xf32>
    %cst_23 = arith.constant 0.353553385 : f32
    %55 = vector.broadcast %cst_23 : f32 to vector<8x8xf32>
    %56 = arith.mulf %54, %55 : vector<8x8xf32>
    %cst_24 = arith.constant dense<0xFF800000> : vector<8xf32>
    %57 = vector.multi_reduction <maximumf>, %56, %cst_24 [1] : vector<8x8xf32> to vector<8xf32>
    %58 = vector.shape_cast %57 : vector<8xf32> to vector<8x1xf32>
    %59 = vector.broadcast %58 : vector<8x1xf32> to vector<8x8xf32>
    %60 = arith.subf %56, %59 : vector<8x8xf32>
    %61 = math.exp %60 : vector<8x8xf32>
    %cst_25 = arith.constant dense<0.000000e+00> : vector<8xf32>
    %62 = vector.multi_reduction <add>, %61, %cst_25 [1] : vector<8x8xf32> to vector<8xf32>
    %63 = vector.shape_cast %62 : vector<8xf32> to vector<8x1xf32>
    %64 = tpu.reciprocal %63 {approx = true} : vector<8x1xf32> -> vector<8x1xf32>
    %65 = vector.broadcast %64 : vector<8x1xf32> to vector<8x8xf32>
    %66 = arith.mulf %61, %65 : vector<8x8xf32>
    %cst_26 = arith.constant dense<0.000000e+00> : vector<8x8xf32>
    %67 = tpu.matmul %66, %52, %cst_26 {dimension_numbers = #tpu.dot_dimension_numbers<[1], [0], [0], [1], [0, 0, 1, 1], [], []>} : vector<8x8xf32>, vector<8x8xf32>, vector<8x8xf32> -> vector<8x8xf32>
    %c16 = arith.constant 16 : index
    %c0_27 = arith.constant 0 : index
    %68 = vector.load %arg4[%c16, %c0_27] : memref<32x32xf32, #tpu.memory_space<vmem>>, vector<8x32xf32>
    %cst_28 = arith.constant dense<0.000000e+00> : vector<8x32xf32>
    %69 = tpu.matmul %67, %68, %cst_28 {dimension_numbers = #tpu.dot_dimension_numbers<[1], [0], [0], [1], [0, 0, 1, 1], [], []>} : vector<8x8xf32>, vector<8x32xf32>, vector<8x32xf32> -> vector<8x32xf32>
    %70 = arith.addf %49, %69 : vector<8x32xf32>
    %71 = vector.extract_strided_slice %6 {offsets = [0, 24], sizes = [8, 8], strides = [1, 1]} : vector<8x96xf32> to vector<8x8xf32>
    %72 = vector.extract_strided_slice %6 {offsets = [0, 56], sizes = [8, 8], strides = [1, 1]} : vector<8x96xf32> to vector<8x8xf32>
    %73 = vector.extract_strided_slice %6 {offsets = [0, 88], sizes = [8, 8], strides = [1, 1]} : vector<8x96xf32> to vector<8x8xf32>
    %74 = tpu.transpose %72, [1, 0] : vector<8x8xf32> -> vector<8x8xf32>
    %cst_29 = arith.constant dense<0.000000e+00> : vector<8x8xf32>
    %75 = tpu.matmul %71, %74, %cst_29 {dimension_numbers = #tpu.dot_dimension_numbers<[1], [0], [0], [1], [0, 0, 1, 1], [], []>} : vector<8x8xf32>, vector<8x8xf32>, vector<8x8xf32> -> vector<8x8xf32>
    %cst_30 = arith.constant 0.353553385 : f32
    %76 = vector.broadcast %cst_30 : f32 to vector<8x8xf32>
    %77 = arith.mulf %75, %76 : vector<8x8xf32>
    %cst_31 = arith.constant dense<0xFF800000> : vector<8xf32>
    %78 = vector.multi_reduction <maximumf>, %77, %cst_31 [1] : vector<8x8xf32> to vector<8xf32>
    %79 = vector.shape_cast %78 : vector<8xf32> to vector<8x1xf32>
    %80 = vector.broadcast %79 : vector<8x1xf32> to vector<8x8xf32>
    %81 = arith.subf %77, %80 : vector<8x8xf32>
    %82 = math.exp %81 : vector<8x8xf32>
    %cst_32 = arith.constant dense<0.000000e+00> : vector<8xf32>
    %83 = vector.multi_reduction <add>, %82, %cst_32 [1] : vector<8x8xf32> to vector<8xf32>
    %84 = vector.shape_cast %83 : vector<8xf32> to vector<8x1xf32>
    %85 = tpu.reciprocal %84 {approx = true} : vector<8x1xf32> -> vector<8x1xf32>
    %86 = vector.broadcast %85 : vector<8x1xf32> to vector<8x8xf32>
    %87 = arith.mulf %82, %86 : vector<8x8xf32>
    %cst_33 = arith.constant dense<0.000000e+00> : vector<8x8xf32>
    %88 = tpu.matmul %87, %73, %cst_33 {dimension_numbers = #tpu.dot_dimension_numbers<[1], [0], [0], [1], [0, 0, 1, 1], [], []>} : vector<8x8xf32>, vector<8x8xf32>, vector<8x8xf32> -> vector<8x8xf32>
    %c24 = arith.constant 24 : index
    %c0_34 = arith.constant 0 : index
    %89 = vector.load %arg4[%c24, %c0_34] : memref<32x32xf32, #tpu.memory_space<vmem>>, vector<8x32xf32>
    %cst_35 = arith.constant dense<0.000000e+00> : vector<8x32xf32>
    %90 = tpu.matmul %88, %89, %cst_35 {dimension_numbers = #tpu.dot_dimension_numbers<[1], [0], [0], [1], [0, 0, 1, 1], [], []>} : vector<8x8xf32>, vector<8x32xf32>, vector<8x32xf32> -> vector<8x32xf32>
    %91 = arith.addf %70, %90 : vector<8x32xf32>
    %c0_36 = arith.constant 0 : index
    %c0_37 = arith.constant 0 : index
    %92 = vector.load %arg5[%c0_36, %c0_37] : memref<1x32xf32, #tpu.memory_space<vmem>>, vector<1x32xf32>
    %93 = vector.broadcast %92 : vector<1x32xf32> to vector<8x32xf32>
    %94 = arith.addf %91, %93 : vector<8x32xf32>
    %95 = arith.addf %94, %1 : vector<8x32xf32>
    %cst_38 = arith.constant dense<0.000000e+00> : vector<8xf32>
    %96 = vector.multi_reduction <add>, %95, %cst_38 [1] : vector<8x32xf32> to vector<8xf32>
    %97 = vector.shape_cast %96 : vector<8xf32> to vector<8x1xf32>
    %cst_39 = arith.constant 3.200000e+01 : f32
    %98 = vector.broadcast %cst_39 : f32 to vector<8x1xf32>
    %99 = arith.divf %97, %98 : vector<8x1xf32>
    %100 = vector.broadcast %99 : vector<8x1xf32> to vector<8x32xf32>
    %101 = arith.subf %95, %100 : vector<8x32xf32>
    %102 = vector.broadcast %99 : vector<8x1xf32> to vector<8x32xf32>
    %103 = arith.subf %95, %102 : vector<8x32xf32>
    %104 = arith.mulf %101, %103 : vector<8x32xf32>
    %cst_40 = arith.constant dense<0.000000e+00> : vector<8xf32>
    %105 = vector.multi_reduction <add>, %104, %cst_40 [1] : vector<8x32xf32> to vector<8xf32>
    %106 = vector.shape_cast %105 : vector<8xf32> to vector<8x1xf32>
    %cst_41 = arith.constant 3.200000e+01 : f32
    %107 = vector.broadcast %cst_41 : f32 to vector<8x1xf32>
    %108 = arith.divf %106, %107 : vector<8x1xf32>
    %109 = vector.broadcast %99 : vector<8x1xf32> to vector<8x32xf32>
    %110 = arith.subf %95, %109 : vector<8x32xf32>
    %cst_42 = arith.constant 9.99999974E-6 : f32
    %111 = vector.broadcast %cst_42 : f32 to vector<8x1xf32>
    %112 = arith.addf %108, %111 : vector<8x1xf32>
    %113 = math.rsqrt %112 : vector<8x1xf32>
    %114 = vector.broadcast %113 : vector<8x1xf32> to vector<8x32xf32>
    %115 = arith.mulf %110, %114 : vector<8x32xf32>
    %c0_43 = arith.constant 0 : index
    %c0_44 = arith.constant 0 : index
    %116 = vector.load %arg6[%c0_43, %c0_44] : memref<1x32xf32, #tpu.memory_space<vmem>>, vector<1x32xf32>
    %117 = vector.broadcast %116 : vector<1x32xf32> to vector<8x32xf32>
    %118 = arith.mulf %115, %117 : vector<8x32xf32>
    %c0_45 = arith.constant 0 : index
    %c0_46 = arith.constant 0 : index
    %119 = vector.load %arg7[%c0_45, %c0_46] : memref<1x32xf32, #tpu.memory_space<vmem>>, vector<1x32xf32>
    %120 = vector.broadcast %119 : vector<1x32xf32> to vector<8x32xf32>
    %121 = arith.addf %118, %120 : vector<8x32xf32>
    %c0_47 = arith.constant 0 : index
    %c0_48 = arith.constant 0 : index
    %122 = vector.load %arg8[%c0_47, %c0_48] : memref<32x192xf32, #tpu.memory_space<vmem>>, vector<32x192xf32>
    %cst_49 = arith.constant dense<0.000000e+00> : vector<8x192xf32>
    %123 = tpu.matmul %121, %122, %cst_49 {dimension_numbers = #tpu.dot_dimension_numbers<[1], [0], [0], [1], [0, 0, 1, 1], [], []>} : vector<8x32xf32>, vector<32x192xf32>, vector<8x192xf32> -> vector<8x192xf32>
    %c0_50 = arith.constant 0 : index
    %c0_51 = arith.constant 0 : index
    %124 = vector.load %arg9[%c0_50, %c0_51] : memref<1x192xf32, #tpu.memory_space<vmem>>, vector<1x192xf32>
    %125 = vector.broadcast %124 : vector<1x192xf32> to vector<8x192xf32>
    %126 = arith.addf %123, %125 : vector<8x192xf32>
    %127 = vector.extract_strided_slice %126 {offsets = [0, 0], sizes = [8, 128], strides = [1, 1]} : vector<8x192xf32> to vector<8x128xf32>
    %cst_52 = arith.constant 0.000000e+00 : f32
    %128 = vector.broadcast %cst_52 : f32 to vector<8x128xf32>
    %129 = arith.maximumf %127, %128 : vector<8x128xf32>
    %130 = vector.extract_strided_slice %126 {offsets = [0, 128], sizes = [8, 64], strides = [1, 1]} : vector<8x192xf32> to vector<8x64xf32>
    %c0_53 = arith.constant 0 : index
    %c0_54 = arith.constant 0 : index
    %131 = vector.load %arg10[%c0_53, %c0_54] : memref<128x64xf32, #tpu.memory_space<vmem>>, vector<128x64xf32>
    %cst_55 = arith.constant dense<0.000000e+00> : vector<8x64xf32>
    %132 = tpu.matmul %129, %131, %cst_55 {dimension_numbers = #tpu.dot_dimension_numbers<[1], [0], [0], [1], [0, 0, 1, 1], [], []>} : vector<8x128xf32>, vector<128x64xf32>, vector<8x64xf32> -> vector<8x64xf32>
    %c0_56 = arith.constant 0 : index
    %c0_57 = arith.constant 0 : index
    %133 = vector.load %arg11[%c0_56, %c0_57] : memref<1x64xf32, #tpu.memory_space<vmem>>, vector<1x64xf32>
    %134 = vector.broadcast %133 : vector<1x64xf32> to vector<8x64xf32>
    %135 = arith.addf %132, %134 : vector<8x64xf32>
    %136 = arith.addf %135, %130 : vector<8x64xf32>
    %cst_58 = arith.constant dense<0.000000e+00> : vector<8xf32>
    %137 = vector.multi_reduction <add>, %136, %cst_58 [1] : vector<8x64xf32> to vector<8xf32>
    %138 = vector.shape_cast %137 : vector<8xf32> to vector<8x1xf32>
    %cst_59 = arith.constant 6.400000e+01 : f32
    %139 = vector.broadcast %cst_59 : f32 to vector<8x1xf32>
    %140 = arith.divf %138, %139 : vector<8x1xf32>
    %141 = vector.broadcast %140 : vector<8x1xf32> to vector<8x64xf32>
    %142 = arith.subf %136, %141 : vector<8x64xf32>
    %143 = vector.broadcast %140 : vector<8x1xf32> to vector<8x64xf32>
    %144 = arith.subf %136, %143 : vector<8x64xf32>
    %145 = arith.mulf %142, %144 : vector<8x64xf32>
    %cst_60 = arith.constant dense<0.000000e+00> : vector<8xf32>
    %146 = vector.multi_reduction <add>, %145, %cst_60 [1] : vector<8x64xf32> to vector<8xf32>
    %147 = vector.shape_cast %146 : vector<8xf32> to vector<8x1xf32>
    %cst_61 = arith.constant 6.400000e+01 : f32
    %148 = vector.broadcast %cst_61 : f32 to vector<8x1xf32>
    %149 = arith.divf %147, %148 : vector<8x1xf32>
    %150 = vector.broadcast %140 : vector<8x1xf32> to vector<8x64xf32>
    %151 = arith.subf %136, %150 : vector<8x64xf32>
    %cst_62 = arith.constant 9.99999974E-6 : f32
    %152 = vector.broadcast %cst_62 : f32 to vector<8x1xf32>
    %153 = arith.addf %149, %152 : vector<8x1xf32>
    %154 = math.rsqrt %153 : vector<8x1xf32>
    %155 = vector.broadcast %154 : vector<8x1xf32> to vector<8x64xf32>
    %156 = arith.mulf %151, %155 : vector<8x64xf32>
    %c0_63 = arith.constant 0 : index
    %c0_64 = arith.constant 0 : index
    %157 = vector.load %arg12[%c0_63, %c0_64] : memref<1x64xf32, #tpu.memory_space<vmem>>, vector<1x64xf32>
    %158 = vector.broadcast %157 : vector<1x64xf32> to vector<8x64xf32>
    %159 = arith.mulf %156, %158 : vector<8x64xf32>
    %c0_65 = arith.constant 0 : index
    %c0_66 = arith.constant 0 : index
    %160 = vector.load %arg13[%c0_65, %c0_66] : memref<1x64xf32, #tpu.memory_space<vmem>>, vector<1x64xf32>
    %161 = vector.broadcast %160 : vector<1x64xf32> to vector<8x64xf32>
    %162 = arith.addf %159, %161 : vector<8x64xf32>
    %c0_67 = arith.constant 0 : index
    %c0_68 = arith.constant 0 : index
    %c0_69 = arith.constant 0 : index
    %163 = vector.load %arg14[%c0_67, %c0_68, %c0_69] : memref<1x8x64xf32, #tpu.memory_space<vmem>>, vector<1x8x64xf32>
    %164 = vector.shape_cast %163 : vector<1x8x64xf32> to vector<8x64xf32>
    %165 = vector.shape_cast %162 : vector<8x64xf32> to vector<1x8x64xf32>
    tpu.vector_store %arg14[%c0_67, %c0_68, %c0_69], %165 {strides = array<i32>} : memref<1x8x64xf32, #tpu.memory_space<vmem>>, vector<1x8x64xf32>,
    return
  }
  func.func @transform_0(%arg0: i32) -> (i32, i32, i32) {
    %c0_i32 = arith.constant 0 : i32
    %c0_i32_0 = arith.constant 0 : i32
    %c0_i32_1 = arith.constant 0 : i32
    return %arg0, %c0_i32, %c0_i32_0 : i32, i32, i32
  }
  func.func @transform_1(%arg0: i32) -> (i32, i32) {
    %c0_i32 = arith.constant 0 : i32
    %c0_i32_0 = arith.constant 0 : i32
    %c0_i32_1 = arith.constant 0 : i32
    return %c0_i32, %c0_i32_0 : i32, i32
  }
  func.func @transform_2(%arg0: i32) -> (i32, i32) {
    %c0_i32 = arith.constant 0 : i32
    %c0_i32_0 = arith.constant 0 : i32
    %c0_i32_1 = arith.constant 0 : i32
    return %c0_i32, %c0_i32_0 : i32, i32
  }
  func.func @transform_3(%arg0: i32) -> (i32, i32) {
    %c0_i32 = arith.constant 0 : i32
    %c0_i32_0 = arith.constant 0 : i32
    %c0_i32_1 = arith.constant 0 : i32
    return %c0_i32, %c0_i32_0 : i32, i32
  }
  func.func @transform_4(%arg0: i32) -> (i32, i32) {
    %c0_i32 = arith.constant 0 : i32
    %c0_i32_0 = arith.constant 0 : i32
    %c0_i32_1 = arith.constant 0 : i32
    return %c0_i32, %c0_i32_0 : i32, i32
  }
  func.func @transform_5(%arg0: i32) -> (i32, i32) {
    %c0_i32 = arith.constant 0 : i32
    %c0_i32_0 = arith.constant 0 : i32
    %c0_i32_1 = arith.constant 0 : i32
    return %c0_i32, %c0_i32_0 : i32, i32
  }
  func.func @transform_6(%arg0: i32) -> (i32, i32) {
    %c0_i32 = arith.constant 0 : i32
    %c0_i32_0 = arith.constant 0 : i32
    %c0_i32_1 = arith.constant 0 : i32
    return %c0_i32, %c0_i32_0 : i32, i32
  }
  func.func @transform_7(%arg0: i32) -> (i32, i32) {
    %c0_i32 = arith.constant 0 : i32
    %c0_i32_0 = arith.constant 0 : i32
    %c0_i32_1 = arith.constant 0 : i32
    return %c0_i32, %c0_i32_0 : i32, i32
  }
  func.func @transform_8(%arg0: i32) -> (i32, i32) {
    %c0_i32 = arith.constant 0 : i32
    %c0_i32_0 = arith.constant 0 : i32
    %c0_i32_1 = arith.constant 0 : i32
    return %c0_i32, %c0_i32_0 : i32, i32
  }
  func.func @transform_9(%arg0: i32) -> (i32, i32) {
    %c0_i32 = arith.constant 0 : i32
    %c0_i32_0 = arith.constant 0 : i32
    %c0_i32_1 = arith.constant 0 : i32
    return %c0_i32, %c0_i32_0 : i32, i32
  }
  func.func @transform_10(%arg0: i32) -> (i32, i32) {
    %c0_i32 = arith.constant 0 : i32
    %c0_i32_0 = arith.constant 0 : i32
    %c0_i32_1 = arith.constant 0 : i32
    return %c0_i32, %c0_i32_0 : i32, i32
  }
  func.func @transform_11(%arg0: i32) -> (i32, i32) {
    %c0_i32 = arith.constant 0 : i32
    %c0_i32_0 = arith.constant 0 : i32
    %c0_i32_1 = arith.constant 0 : i32
    return %c0_i32, %c0_i32_0 : i32, i32
  }
  func.func @transform_12(%arg0: i32) -> (i32, i32) {
    %c0_i32 = arith.constant 0 : i32
    %c0_i32_0 = arith.constant 0 : i32
    %c0_i32_1 = arith.constant 0 : i32
    return %c0_i32, %c0_i32_0 : i32, i32
  }
  func.func @transform_13(%arg0: i32) -> (i32, i32, i32) {
    %c0_i32 = arith.constant 0 : i32
    %c0_i32_0 = arith.constant 0 : i32
    %c0_i32_1 = arith.constant 0 : i32
    return %arg0, %c0_i32, %c0_i32_0 : i32, i32, i32
  }
}

</mosaic_0001>

<llo_original>
// kernel: tpu_custom_call.1
$region0: #{tpu_custom_call.1}
  #allocation0 [shape = 'u32[]', space=smem, size = 0x4, offset = 0x4, fixed_abs, tag = 'smem constant byte address 0x4 - core index']
  #allocation1 [shape = 'u32[144,128]{1,0:T(1,128)}', space=vmem, size = 0x12000, scoped, tag = 'internal scratch']
  %s0 = inlined_call_operand.vmem [shape: f32[2,8,32], index: 0, kind: input, shape index: {}]
  %s1 = inlined_call_operand.vmem [shape: f32[32,96], index: 1, kind: input, shape index: {}]
  %s2 = inlined_call_operand.vmem [shape: f32[1,96], index: 2, kind: input, shape index: {}]
  %s3 = inlined_call_operand.vmem [shape: f32[32,32], index: 3, kind: input, shape index: {}]
  %s4 = inlined_call_operand.vmem [shape: f32[1,32], index: 4, kind: input, shape index: {}]
  %s5 = inlined_call_operand.vmem [shape: f32[1,32], index: 5, kind: input, shape index: {}]
  %s6 = inlined_call_operand.vmem [shape: f32[1,32], index: 6, kind: input, shape index: {}]
  %s7 = inlined_call_operand.vmem [shape: f32[32,192], index: 7, kind: input, shape index: {}]
  %s8 = inlined_call_operand.vmem [shape: f32[1,192], index: 8, kind: input, shape index: {}]
  %s9 = inlined_call_operand.vmem [shape: f32[128,64], index: 9, kind: input, shape index: {}]
  %s10 = inlined_call_operand.vmem [shape: f32[1,64], index: 10, kind: input, shape index: {}]
  %s11 = inlined_call_operand.vmem [shape: f32[1,64], index: 11, kind: input, shape index: {}]
  %s12 = inlined_call_operand.vmem [shape: f32[1,64], index: 12, kind: input, shape index: {}]
  %s13 = inlined_call_operand.hbm [shape: f32[2,8,64], index: 13, kind: output, shape index: {}]
  %s14 = sld [smem:[#allocation0]]
  $region85: #{tpu_custom_call.1} parent=0
    _
  %s16 = ssub.s32 1, %s14
  %s17 = scalar_select 0, %s16, %s14
  $region1: #{tpu_custom_call.1} parent=0
    #allocation2 [shape = 'u8[8192]{0}', space=vmem, size = 0x2000, scoped, tag = 'output window, operand 0']
    #allocation3 [shape = 's32[2]{0}', space=sflag, size = 0x8, scoped, tag = 'scoped memory for tpu_custom_call.1']
    %18 = vsyncpa [#allocation3], 0
    %s19 = scalar_lea.sflag [#allocation3], 1
    %20 = vsyncpa %s19, 0
    loop: start=0, step=1, limit=4
    $region2: #{tpu_custom_call.1} parent=1 // loop_pre_header
      _
    $region3: #{tpu_custom_call.1} parent=1 // loop_header
      %s22 = sphi 0, %s26
      %p23 = scmp.ge.s32.totalorder %s22, 4
      %s32 = sphi 0, %s34
      %s35 = sphi 0, %s32
      %s36 = sphi 0, %s35
      %s52 = sphi 0, %s36
      %s56 = sphi 0, %s56
      %s58 = sphi 0, %s56
      %s59 = sphi 0, %s58
      %s73 = sphi 0, %s59
      %s77 = sphi 0, %s77
      %s79 = sphi 0, %s77
      %s80 = sphi 0, %s79
      %s94 = sphi 0, %s80
      %s98 = sphi 0, %s98
      %s100 = sphi 0, %s98
      %s101 = sphi 0, %s100
      %s115 = sphi 0, %s101
      %s119 = sphi 0, %s119
      %s121 = sphi 0, %s119
      %s122 = sphi 0, %s121
      %s136 = sphi 0, %s122
      %s140 = sphi 0, %s140
      %s142 = sphi 0, %s140
      %s143 = sphi 0, %s142
      %s157 = sphi 0, %s143
      %s161 = sphi 0, %s161
      %s163 = sphi 0, %s161
      %s164 = sphi 0, %s163
      %s178 = sphi 0, %s164
      %s182 = sphi 0, %s182
      %s184 = sphi 0, %s182
      %s185 = sphi 0, %s184
      %s199 = sphi 0, %s185
      %s203 = sphi 0, %s203
      %s205 = sphi 0, %s203
      %s206 = sphi 0, %s205
      %s220 = sphi 0, %s206
      %s224 = sphi 0, %s224
      %s226 = sphi 0, %s224
      %s227 = sphi 0, %s226
      %s241 = sphi 0, %s227
      %s245 = sphi 0, %s245
      %s247 = sphi 0, %s245
      %s248 = sphi 0, %s247
      %s262 = sphi 0, %s248
      %s266 = sphi 0, %s266
      %s268 = sphi 0, %s266
      %s269 = sphi 0, %s268
      %s283 = sphi 0, %s269
      %s287 = sphi 0, %s287
      %s289 = sphi 0, %s287
      %s290 = sphi 0, %s289
      %s304 = sphi 0, %s290
      %s310 = sphi 0, %s312
      %s313 = sphi 0, %s310
      %s314 = sphi 0, %s313
      %s330 = sphi 0, %s314
    $region4: #{tpu_custom_call.1} parent=1 // loop_header_branch
      %25 = sbr.rel (%p23) target = $region8
    $region5: #{tpu_custom_call.1} parent=1 // loop_body
      %s27 = ssub.s32 %s22, 1
      %s28 = ssub.s32 %s22, 2
      %s29 = sadd.s32 %s22, 1
      %s30 = ssub.s32 %s22, %s29
      %p31 = scmp.eq.s32.totalorder %s30, 0
      %s33 = sadd.s32 %s32, 1
      %s34 = scalar_select %p31, %s32, %s33
      %p37 = pneg %p31
      %p38 = scmp.eq.s32.totalorder %s22, 1
      %p39 = por %p37, %p38
      %p40 = scmp.ne.s32.totalorder %s32, %s35
      %p41 = scmp.eq.s32.totalorder %s22, 0
      %p42 = por %p40, %p41
      %p43 = scmp.ne.s32.totalorder %s32, %s35
      %p44 = scmp.eq.s32.totalorder %s27, 1
      %p45 = por %p43, %p44
      %p46 = scmp.ne.s32.totalorder %s35, %s36
      %p47 = scmp.eq.s32.totalorder %s27, 0
      %p48 = por %p46, %p47
      %p49 = scmp.ne.s32.totalorder %s35, %s36
      %p50 = scmp.eq.s32.totalorder %s28, 1
      %p51 = por %p49, %p50
      %p53 = scmp.ne.s32.totalorder %s36, %s52
      %p54 = scmp.eq.s32.totalorder %s28, 0
      %p55 = por %p53, %p54
      %s57 = sadd.s32 %s56, 1
      %p60 = scmp.eq.s32.totalorder %s22, 1
      %p61 = scmp.ne.s32.totalorder %s56, %s58
      %p62 = scmp.eq.s32.totalorder %s22, 0
      %p63 = por %p61, %p62
      %p64 = scmp.ne.s32.totalorder %s56, %s58
      %p65 = scmp.eq.s32.totalorder %s27, 1
      %p66 = por %p64, %p65
      %p67 = scmp.ne.s32.totalorder %s58, %s59
      %p68 = scmp.eq.s32.totalorder %s27, 0
      %p69 = por %p67, %p68
      %p70 = scmp.ne.s32.totalorder %s58, %s59
      %p71 = scmp.eq.s32.totalorder %s28, 1
      %p72 = por %p70, %p71
      %p74 = scmp.ne.s32.totalorder %s59, %s73
      %p75 = scmp.eq.s32.totalorder %s28, 0
      %p76 = por %p74, %p75
      %s78 = sadd.s32 %s77, 1
      %p81 = scmp.eq.s32.totalorder %s22, 1
      %p82 = scmp.ne.s32.totalorder %s77, %s79
      %p83 = scmp.eq.s32.totalorder %s22, 0
      %p84 = por %p82, %p83
      %p85 = scmp.ne.s32.totalorder %s77, %s79
      %p86 = scmp.eq.s32.totalorder %s27, 1
      %p87 = por %p85, %p86
      %p88 = scmp.ne.s32.totalorder %s79, %s80
      %p89 = scmp.eq.s32.totalorder %s27, 0
      %p90 = por %p88, %p89
      %p91 = scmp.ne.s32.totalorder %s79, %s80
      %p92 = scmp.eq.s32.totalorder %s28, 1
      %p93 = por %p91, %p92
      %p95 = scmp.ne.s32.totalorder %s80, %s94
      %p96 = scmp.eq.s32.totalorder %s28, 0
      %p97 = por %p95, %p96
      %s99 = sadd.s32 %s98, 1
      %p102 = scmp.eq.s32.totalorder %s22, 1
      %p103 = scmp.ne.s32.totalorder %s98, %s100
      %p104 = scmp.eq.s32.totalorder %s22, 0
      %p105 = por %p103, %p104
      %p106 = scmp.ne.s32.totalorder %s98, %s100
      %p107 = scmp.eq.s32.totalorder %s27, 1
      %p108 = por %p106, %p107
      %p109 = scmp.ne.s32.totalorder %s100, %s101
      %p110 = scmp.eq.s32.totalorder %s27, 0
      %p111 = por %p109, %p110
      %p112 = scmp.ne.s32.totalorder %s100, %s101
      %p113 = scmp.eq.s32.totalorder %s28, 1
      %p114 = por %p112, %p113
      %p116 = scmp.ne.s32.totalorder %s101, %s115
      %p117 = scmp.eq.s32.totalorder %s28, 0
      %p118 = por %p116, %p117
      %s120 = sadd.s32 %s119, 1
      %p123 = scmp.eq.s32.totalorder %s22, 1
      %p124 = scmp.ne.s32.totalorder %s119, %s121
      %p125 = scmp.eq.s32.totalorder %s22, 0
      %p126 = por %p124, %p125
      %p127 = scmp.ne.s32.totalorder %s119, %s121
      %p128 = scmp.eq.s32.totalorder %s27, 1
      %p129 = por %p127, %p128
      %p130 = scmp.ne.s32.totalorder %s121, %s122
      %p131 = scmp.eq.s32.totalorder %s27, 0
      %p132 = por %p130, %p131
      %p133 = scmp.ne.s32.totalorder %s121, %s122
      %p134 = scmp.eq.s32.totalorder %s28, 1
      %p135 = por %p133, %p134
      %p137 = scmp.ne.s32.totalorder %s122, %s136
      %p138 = scmp.eq.s32.totalorder %s28, 0
      %p139 = por %p137, %p138
      %s141 = sadd.s32 %s140, 1
      %p144 = scmp.eq.s32.totalorder %s22, 1
      %p145 = scmp.ne.s32.totalorder %s140, %s142
      %p146 = scmp.eq.s32.totalorder %s22, 0
      %p147 = por %p145, %p146
      %p148 = scmp.ne.s32.totalorder %s140, %s142
      %p149 = scmp.eq.s32.totalorder %s27, 1
      %p150 = por %p148, %p149
      %p151 = scmp.ne.s32.totalorder %s142, %s143
      %p152 = scmp.eq.s32.totalorder %s27, 0
      %p153 = por %p151, %p152
      %p154 = scmp.ne.s32.totalorder %s142, %s143
      %p155 = scmp.eq.s32.totalorder %s28, 1
      %p156 = por %p154, %p155
      %p158 = scmp.ne.s32.totalorder %s143, %s157
      %p159 = scmp.eq.s32.totalorder %s28, 0
      %p160 = por %p158, %p159
      %s162 = sadd.s32 %s161, 1
      %p165 = scmp.eq.s32.totalorder %s22, 1
      %p166 = scmp.ne.s32.totalorder %s161, %s163
      %p167 = scmp.eq.s32.totalorder %s22, 0
      %p168 = por %p166, %p167
      %p169 = scmp.ne.s32.totalorder %s161, %s163
      %p170 = scmp.eq.s32.totalorder %s27, 1
      %p171 = por %p169, %p170
      %p172 = scmp.ne.s32.totalorder %s163, %s164
      %p173 = scmp.eq.s32.totalorder %s27, 0
      %p174 = por %p172, %p173
      %p175 = scmp.ne.s32.totalorder %s163, %s164
      %p176 = scmp.eq.s32.totalorder %s28, 1
      %p177 = por %p175, %p176
      %p179 = scmp.ne.s32.totalorder %s164, %s178
      %p180 = scmp.eq.s32.totalorder %s28, 0
      %p181 = por %p179, %p180
      %s183 = sadd.s32 %s182, 1
      %p186 = scmp.eq.s32.totalorder %s22, 1
      %p187 = scmp.ne.s32.totalorder %s182, %s184
      %p188 = scmp.eq.s32.totalorder %s22, 0
      %p189 = por %p187, %p188
      %p190 = scmp.ne.s32.totalorder %s182, %s184
      %p191 = scmp.eq.s32.totalorder %s27, 1
      %p192 = por %p190, %p191
      %p193 = scmp.ne.s32.totalorder %s184, %s185
      %p194 = scmp.eq.s32.totalorder %s27, 0
      %p195 = por %p193, %p194
      %p196 = scmp.ne.s32.totalorder %s184, %s185
      %p197 = scmp.eq.s32.totalorder %s28, 1
      %p198 = por %p196, %p197
      %p200 = scmp.ne.s32.totalorder %s185, %s199
      %p201 = scmp.eq.s32.totalorder %s28, 0
      %p202 = por %p200, %p201
      %s204 = sadd.s32 %s203, 1
      %p207 = scmp.eq.s32.totalorder %s22, 1
      %p208 = scmp.ne.s32.totalorder %s203, %s205
      %p209 = scmp.eq.s32.totalorder %s22, 0
      %p210 = por %p208, %p209
      %p211 = scmp.ne.s32.totalorder %s203, %s205
      %p212 = scmp.eq.s32.totalorder %s27, 1
      %p213 = por %p211, %p212
      %p214 = scmp.ne.s32.totalorder %s205, %s206
      %p215 = scmp.eq.s32.totalorder %s27, 0
      %p216 = por %p214, %p215
      %p217 = scmp.ne.s32.totalorder %s205, %s206
      %p218 = scmp.eq.s32.totalorder %s28, 1
      %p219 = por %p217, %p218
      %p221 = scmp.ne.s32.totalorder %s206, %s220
      %p222 = scmp.eq.s32.totalorder %s28, 0
      %p223 = por %p221, %p222
      %s225 = sadd.s32 %s224, 1
      %p228 = scmp.eq.s32.totalorder %s22, 1
      %p229 = scmp.ne.s32.totalorder %s224, %s226
      %p230 = scmp.eq.s32.totalorder %s22, 0
      %p231 = por %p229, %p230
      %p232 = scmp.ne.s32.totalorder %s224, %s226
      %p233 = scmp.eq.s32.totalorder %s27, 1
      %p234 = por %p232, %p233
      %p235 = scmp.ne.s32.totalorder %s226, %s227
      %p236 = scmp.eq.s32.totalorder %s27, 0
      %p237 = por %p235, %p236
      %p238 = scmp.ne.s32.totalorder %s226, %s227
      %p239 = scmp.eq.s32.totalorder %s28, 1
      %p240 = por %p238, %p239
      %p242 = scmp.ne.s32.totalorder %s227, %s241
      %p243 = scmp.eq.s32.totalorder %s28, 0
      %p244 = por %p242, %p243
      %s246 = sadd.s32 %s245, 1
      %p249 = scmp.eq.s32.totalorder %s22, 1
      %p250 = scmp.ne.s32.totalorder %s245, %s247
      %p251 = scmp.eq.s32.totalorder %s22, 0
      %p252 = por %p250, %p251
      %p253 = scmp.ne.s32.totalorder %s245, %s247
      %p254 = scmp.eq.s32.totalorder %s27, 1
      %p255 = por %p253, %p254
      %p256 = scmp.ne.s32.totalorder %s247, %s248
      %p257 = scmp.eq.s32.totalorder %s27, 0
      %p258 = por %p256, %p257
      %p259 = scmp.ne.s32.totalorder %s247, %s248
      %p260 = scmp.eq.s32.totalorder %s28, 1
      %p261 = por %p259, %p260
      %p263 = scmp.ne.s32.totalorder %s248, %s262
      %p264 = scmp.eq.s32.totalorder %s28, 0
      %p265 = por %p263, %p264
      %s267 = sadd.s32 %s266, 1
      %p270 = scmp.eq.s32.totalorder %s22, 1
      %p271 = scmp.ne.s32.totalorder %s266, %s268
      %p272 = scmp.eq.s32.totalorder %s22, 0
      %p273 = por %p271, %p272
      %p274 = scmp.ne.s32.totalorder %s266, %s268
      %p275 = scmp.eq.s32.totalorder %s27, 1
      %p276 = por %p274, %p275
      %p277 = scmp.ne.s32.totalorder %s268, %s269
      %p278 = scmp.eq.s32.totalorder %s27, 0
      %p279 = por %p277, %p278
      %p280 = scmp.ne.s32.totalorder %s268, %s269
      %p281 = scmp.eq.s32.totalorder %s28, 1
      %p282 = por %p280, %p281
      %p284 = scmp.ne.s32.totalorder %s269, %s283
      %p285 = scmp.eq.s32.totalorder %s28, 0
      %p286 = por %p284, %p285
      %s288 = sadd.s32 %s287, 1
      %p291 = scmp.eq.s32.totalorder %s22, 1
      %p292 = scmp.ne.s32.totalorder %s287, %s289
      %p293 = scmp.eq.s32.totalorder %s22, 0
      %p294 = por %p292, %p293
      %p295 = scmp.ne.s32.totalorder %s287, %s289
      %p296 = scmp.eq.s32.totalorder %s27, 1
      %p297 = por %p295, %p296
      %p298 = scmp.ne.s32.totalorder %s289, %s290
      %p299 = scmp.eq.s32.totalorder %s27, 0
      %p300 = por %p298, %p299
      %p301 = scmp.ne.s32.totalorder %s289, %s290
      %p302 = scmp.eq.s32.totalorder %s28, 1
      %p303 = por %p301, %p302
      %p305 = scmp.ne.s32.totalorder %s290, %s304
      %p306 = scmp.eq.s32.totalorder %s28, 0
      %p307 = por %p305, %p306
      %s308 = ssub.s32 %s22, %s29
      %p309 = scmp.eq.s32.totalorder %s308, 0
      %s311 = sadd.s32 %s310, 1
      %s312 = scalar_select %p309, %s310, %s311
      %p315 = pneg %p309
      %p316 = scmp.eq.s32.totalorder %s22, 1
      %p317 = por %p315, %p316
      %p318 = scmp.ne.s32.totalorder %s310, %s313
      %p319 = scmp.eq.s32.totalorder %s22, 0
      %p320 = por %p318, %p319
      %p321 = scmp.ne.s32.totalorder %s310, %s313
      %p322 = scmp.eq.s32.totalorder %s27, 1
      %p323 = por %p321, %p322
      %p324 = scmp.ne.s32.totalorder %s313, %s314
      %p325 = scmp.eq.s32.totalorder %s27, 0
      %p326 = por %p324, %p325
      %p327 = scmp.ne.s32.totalorder %s313, %s314
      %p328 = scmp.eq.s32.totalorder %s28, 1
      %p329 = por %p327, %p328
      %p331 = scmp.ne.s32.totalorder %s314, %s330
      %p332 = scmp.eq.s32.totalorder %s28, 0
      %p333 = por %p331, %p332
      %p334 = scmp.le.s32.totalorder 1, %s22
      %p335 = scmp.lt.s32.totalorder %s22, 3
      %p336 = pnand %p334, %p335
      %p337 = pneg %p336
      // Predicated region
      $region9: #{tpu_custom_call.1} parent=5 // pred_check
        _
      $region10: #{tpu_custom_call.1} parent=5 // pred_check_branch
        %339 = sbr.rel (%p336) target = $region12
      $region11: #{tpu_custom_call.1} parent=5 // pred_region
        %s340 = ssub.s32 %s22, 1
        // Predicated region
        $region13: #{tpu_custom_call.1} parent=11 // pred_check
          %p341 = pneg %p69
        $region14: #{tpu_custom_call.1} parent=11 // pred_check_branch
          %343 = sbr.rel (%p341) target = $region16
        $region15: #{tpu_custom_call.1} parent=11 // pred_region
          _
        $region16: #{tpu_custom_call.1} parent=11 // pred_fallthru
          _
        // Predicated region
        $region17: #{tpu_custom_call.1} parent=11 // pred_check
          %p344 = pneg %p90
        $region18: #{tpu_custom_call.1} parent=11 // pred_check_branch
          %346 = sbr.rel (%p344) target = $region20
        $region19: #{tpu_custom_call.1} parent=11 // pred_region
          _
        $region20: #{tpu_custom_call.1} parent=11 // pred_fallthru
          _
        // Predicated region
        $region21: #{tpu_custom_call.1} parent=11 // pred_check
          %p347 = pneg %p111
        $region22: #{tpu_custom_call.1} parent=11 // pred_check_branch
          %349 = sbr.rel (%p347) target = $region24
        $region23: #{tpu_custom_call.1} parent=11 // pred_region
          _
        $region24: #{tpu_custom_call.1} parent=11 // pred_fallthru
          _
        // Predicated region
        $region25: #{tpu_custom_call.1} parent=11 // pred_check
          %p350 = pneg %p132
        $region26: #{tpu_custom_call.1} parent=11 // pred_check_branch
          %352 = sbr.rel (%p350) target = $region28
        $region27: #{tpu_custom_call.1} parent=11 // pred_region
          _
        $region28: #{tpu_custom_call.1} parent=11 // pred_fallthru
          _
        // Predicated region
        $region29: #{tpu_custom_call.1} parent=11 // pred_check
          %p353 = pneg %p153
        $region30: #{tpu_custom_call.1} parent=11 // pred_check_branch
          %355 = sbr.rel (%p353) target = $region32
        $region31: #{tpu_custom_call.1} parent=11 // pred_region
          _
        $region32: #{tpu_custom_call.1} parent=11 // pred_fallthru
          _
        // Predicated region
        $region33: #{tpu_custom_call.1} parent=11 // pred_check
          %p356 = pneg %p174
        $region34: #{tpu_custom_call.1} parent=11 // pred_check_branch
          %358 = sbr.rel (%p356) target = $region36
        $region35: #{tpu_custom_call.1} parent=11 // pred_region
          _
        $region36: #{tpu_custom_call.1} parent=11 // pred_fallthru
          _
        // Predicated region
        $region37: #{tpu_custom_call.1} parent=11 // pred_check
          %p359 = pneg %p195
        $region38: #{tpu_custom_call.1} parent=11 // pred_check_branch
          %361 = sbr.rel (%p359) target = $region40
        $region39: #{tpu_custom_call.1} parent=11 // pred_region
          _
        $region40: #{tpu_custom_call.1} parent=11 // pred_fallthru
          _
        // Predicated region
        $region41: #{tpu_custom_call.1} parent=11 // pred_check
          %p362 = pneg %p216
        $region42: #{tpu_custom_call.1} parent=11 // pred_check_branch
          %364 = sbr.rel (%p362) target = $region44
        $region43: #{tpu_custom_call.1} parent=11 // pred_region
          _
        $region44: #{tpu_custom_call.1} parent=11 // pred_fallthru
          _
        // Predicated region
        $region45: #{tpu_custom_call.1} parent=11 // pred_check
          %p365 = pneg %p237
        $region46: #{tpu_custom_call.1} parent=11 // pred_check_branch
          %367 = sbr.rel (%p365) target = $region48
        $region47: #{tpu_custom_call.1} parent=11 // pred_region
          _
        $region48: #{tpu_custom_call.1} parent=11 // pred_fallthru
          _
        // Predicated region
        $region49: #{tpu_custom_call.1} parent=11 // pred_check
          %p368 = pneg %p258
        $region50: #{tpu_custom_call.1} parent=11 // pred_check_branch
          %370 = sbr.rel (%p368) target = $region52
        $region51: #{tpu_custom_call.1} parent=11 // pred_region
          _
        $region52: #{tpu_custom_call.1} parent=11 // pred_fallthru
          _
        // Predicated region
        $region53: #{tpu_custom_call.1} parent=11 // pred_check
          %p371 = pneg %p279
        $region54: #{tpu_custom_call.1} parent=11 // pred_check_branch
          %373 = sbr.rel (%p371) target = $region56
        $region55: #{tpu_custom_call.1} parent=11 // pred_region
          _
        $region56: #{tpu_custom_call.1} parent=11 // pred_fallthru
          _
        // Predicated region
        $region57: #{tpu_custom_call.1} parent=11 // pred_check
          %p374 = pneg %p300
        $region58: #{tpu_custom_call.1} parent=11 // pred_check_branch
          %376 = sbr.rel (%p374) target = $region60
        $region59: #{tpu_custom_call.1} parent=11 // pred_region
          _
        $region60: #{tpu_custom_call.1} parent=11 // pred_fallthru
          _
      $region12: #{tpu_custom_call.1} parent=5 // pred_fallthru
        _
      %p377 = scmp.lt.s32.totalorder %s22, 2
      // Predicated region
      $region61: #{tpu_custom_call.1} parent=5 // pred_check
        %p378 = pneg %p377
      $region62: #{tpu_custom_call.1} parent=5 // pred_check_branch
        %380 = sbr.rel (%p378) target = $region64
      $region63: #{tpu_custom_call.1} parent=5 // pred_region
        // Predicated region
        $region65: #{tpu_custom_call.1} parent=63 // pred_check
          %p381 = pneg %p42
        $region66: #{tpu_custom_call.1} parent=63 // pred_check_branch
          %383 = sbr.rel (%p381) target = $region68
        $region67: #{tpu_custom_call.1} parent=63 // pred_region
          %p384 = scmp.lt.s32.totalorder %s22, 1
          %s385 = scalar_select %p384, %s22, 1
          %s386 = smul.addr %s385, 8
          %s387 = scalar_lea.vmem %s0, %s386
        $region68: #{tpu_custom_call.1} parent=63 // pred_fallthru
          _
      $region64: #{tpu_custom_call.1} parent=5 // pred_fallthru
        _
      %p388 = scmp.le.s32.totalorder 1, %s22
      %p389 = scmp.lt.s32.totalorder %s22, 3
      %p390 = pnand %p388, %p389
      %p391 = pneg %p390
      // Predicated region
      $region69: #{tpu_custom_call.1} parent=5 // pred_check
        _
      $region70: #{tpu_custom_call.1} parent=5 // pred_check_branch
        %393 = sbr.rel (%p390) target = $region72
      $region71: #{tpu_custom_call.1} parent=5 // pred_region
        %s394 = ssub.s32 %s22, 1
        %p395 = scmp.lt.s32.totalorder %s27, 1
        %s396 = scalar_select %p395, %s27, 1
        %s397 = smul.addr %s396, 8
        %s398 = scalar_lea.vmem %s0, %s397
        %p399 = pneg %p48
        %p400 = pneg %p45
        %p401 = pneg %p69
        %p402 = pneg %p66
        %p403 = pneg %p90
        %p404 = pneg %p87
        %p405 = pneg %p111
        %p406 = pneg %p108
        %p407 = pneg %p132
        %p408 = pneg %p129
        %p409 = pneg %p153
        %p410 = pneg %p150
        %p411 = pneg %p174
        %p412 = pneg %p171
        %p413 = pneg %p195
        %p414 = pneg %p192
        %p415 = pneg %p216
        %p416 = pneg %p213
        %p417 = pneg %p237
        %p418 = pneg %p234
        %p419 = pneg %p258
        %p420 = pneg %p255
        %p421 = pneg %p279
        %p422 = pneg %p276
        %p423 = pneg %p300
        %p424 = pneg %p297
        %p425 = pneg %p326
        %p426 = pneg %p323
        %s427 = sand.u32 %s313, 1
        %s428 = scalar_lea.sflag [#allocation3], %s427
        %s429 = sand.u32 %s313, 1
        %s430 = smul.addr %s429, 8
        %s431 = scalar_lea.vmem [#allocation2], %s430
        %p432 = scmp.lt.s32.totalorder %s27, 1
        %s433 = scalar_select %p432, %s27, 1
        %s434 = smul.addr %s433, 8
        %s435 = scalar_lea.vmem %s0, %s434
        %v436 = vld [vmem:[%s435] sm:$0xff]
        %v437 = vld [vmem:[%s1] sm:$0xff]
        %v438 = vld [vmem:[%s1 + $0x8] sm:$0xff]
        %v439 = vld [vmem:[%s1 + $0x10] sm:$0xff]
        %v440 = vld [vmem:[%s1 + $0x18] sm:$0xff]
        %v441 = vld [vmem:[%s2] sm:$0x1]
        %v443 = vlaneseq
        %v444 = vshrl.u32 %v443, 7
        %v445 = vsub.s32 0, %v444
        %v446 = vrot.slane %v441, %v445
        %vm448 = vcmask 261120
        %v450 = vsel %vm448, %v436, 0
        %452 = vmatprep.subr.mxu0 0.0
        %453 = vmatpush1.msra.mxu0 %v437
        %454 = vmatprep.subr.mxu0 0.0
        %455 = vmatpush1.msra.mxu0 %v438
        %456 = vmatprep.subr.mxu0 0.0
        %457 = vmatpush1.msra.mxu0 %v439
        %458 = vmatprep.subr.mxu0 0.0
        %459 = vmatpush1.msra.mxu0 %v440
        %460 = vmatprep.subr.mxu0 0.0
        %461 = vmatpush1.msra.mxu0 0.0
        %462 = vmatprep.subr.mxu0 0.0
        %463 = vmatpush1.msra.mxu0 0.0
        %464 = vmatprep.subr.mxu0 0.0
        %465 = vmatpush1.msra.mxu0 0.0
        %466 = vmatprep.subr.mxu0 0.0
        %467 = vmatpush1.msra.mxu0 0.0
        %468 = vmatprep.subr.mxu0 0.0
        %469 = vmatpush1.msra.mxu0 0.0
        %470 = vmatprep.subr.mxu0 0.0
        %471 = vmatpush1.msra.mxu0 0.0
        %472 = vmatprep.subr.mxu0 0.0
        %473 = vmatpush1.msra.mxu0 0.0
        %474 = vmatprep.subr.mxu0 0.0
        %475 = vmatpush1.msra.mxu0 0.0
        %476 = vmatprep.subr.mxu0 0.0
        %477 = vmatpush1.msra.mxu0 0.0
        %478 = vmatprep.subr.mxu0 0.0
        %479 = vmatpush1.msra.mxu0 0.0
        %480 = vmatprep.subr.mxu0 0.0
        %481 = vmatpush1.msra.mxu0 0.0
        %482 = vmatprep.subr.mxu0 0.0
        %483 = vmatpush1.msra.mxu0 0.0
        %484 = vmatprep.subr.mxu0 0.0
        %485 = vmatpush1.msra.mxu0 0.0
        %486 = vmatprep.subr.mxu0 0.0
        %487 = vmatpush1.msra.mxu0 0.0
        %488 = vmatprep.subr.mxu0 0.0
        %489 = vmatpush1.msra.mxu0 0.0
        %490 = vmatprep.subr.mxu0 0.0
        %491 = vmatpush1.msra.mxu0 0.0
        %492 = vmatprep.subr.mxu0 0.0
        %493 = vmatpush1.msra.mxu0 0.0
        %494 = vmatprep.subr.mxu0 0.0
        %495 = vmatpush1.msra.mxu0 0.0
        %496 = vmatprep.subr.mxu0 0.0
        %497 = vmatpush1.msra.mxu0 0.0
        %498 = vmatprep.subr.mxu0 0.0
        %499 = vmatpush1.msra.mxu0 0.0
        %500 = vmatprep.subr.mxu0 0.0
        %501 = vmatpush1.msra.mxu0 0.0
        %502 = vmatprep.subr.mxu0 0.0
        %503 = vmatpush1.msra.mxu0 0.0
        %504 = vmatprep.subr.mxu0 0.0
        %505 = vmatpush1.msra.mxu0 0.0
        %506 = vmatprep.subr.mxu0 0.0
        %507 = vmatpush1.msra.mxu0 0.0
        %508 = vmatprep.subr.mxu0 0.0
        %509 = vmatpush1.msra.mxu0 0.0
        %510 = vmatprep.subr.mxu0 0.0
        %511 = vmatpush1.msra.mxu0 0.0
        %512 = vmatprep.subr.mxu0 0.0
        %513 = vmatpush1.msra.mxu0 0.0
        %514 = vmatprep.subr.mxu0 0.0
        %515 = vmatpush1.msra.mxu0 0.0
        %516 = vmatprep.mubr.f32.mxu0 0.0
        %517 = vmatmul.mubr.f32.gmra.mrb[0].mxu0 %v450
        %v518 = vpop.f32.mrb[0].mxu0
        %v519 = vadd.f32 %v446, %v518
        %v520 = vpop.f32.mrb[0].mxu0
        %521 = vdwg.mxu0
        %523 = vrot.lane.b32.xlu0 %v519, 96
        %v524 = vpop.permute.xlu0 %523
        %vm525 = vcmask 64512
        %v526 = vsel %vm525, %v519, 0
        %v528 = vsel %vm525, %v524, 0
        %530 = vmatprep.subr.mxu0 0.0
        %531 = vmatpush1.xpose.msra.mxu0 %v528
        %532 = vmatprep.subr.mxu0 0.0
        %533 = vmatpush1.xpose.msra.mxu0 0.0
        %534 = vmatprep.subr.mxu0 0.0
        %535 = vmatpush1.xpose.msra.mxu0 0.0
        %536 = vmatprep.subr.mxu0 0.0
        %537 = vmatpush1.xpose.msra.mxu0 0.0
        %538 = vmatprep.subr.mxu0 0.0
        %539 = vmatpush1.xpose.msra.mxu0 0.0
        %540 = vmatprep.subr.mxu0 0.0
        %541 = vmatpush1.xpose.msra.mxu0 0.0
        %542 = vmatprep.subr.mxu0 0.0
        %543 = vmatpush1.xpose.msra.mxu0 0.0
        %544 = vmatprep.subr.mxu0 0.0
        %545 = vmatpush1.xpose.msra.mxu0 0.0
        %546 = vmatprep.subr.mxu0 0.0
        %547 = vmatpush1.xpose.msra.mxu0 0.0
        %548 = vmatprep.subr.mxu0 0.0
        %549 = vmatpush1.xpose.msra.mxu0 0.0
        %550 = vmatprep.subr.mxu0 0.0
        %551 = vmatpush1.xpose.msra.mxu0 0.0
        %552 = vmatprep.subr.mxu0 0.0
        %553 = vmatpush1.xpose.msra.mxu0 0.0
        %554 = vmatprep.subr.mxu0 0.0
        %555 = vmatpush1.xpose.msra.mxu0 0.0
        %556 = vmatprep.subr.mxu0 0.0
        %557 = vmatpush1.xpose.msra.mxu0 0.0
        %558 = vmatprep.subr.mxu0 0.0
        %559 = vmatpush1.xpose.msra.mxu0 0.0
        %560 = vmatprep.subr.mxu0 0.0
        %561 = vmatpush1.xpose.msra.mxu0 0.0
        %562 = vmatprep.subr.mxu0 0.0
        %563 = vmatpush1.xpose.msra.mxu0 0.0
        %564 = vmatprep.subr.mxu0 0.0
        %565 = vmatpush1.xpose.msra.mxu0 0.0
        %566 = vmatprep.subr.mxu0 0.0
        %567 = vmatpush1.xpose.msra.mxu0 0.0
        %568 = vmatprep.subr.mxu0 0.0
        %569 = vmatpush1.xpose.msra.mxu0 0.0
        %570 = vmatprep.subr.mxu0 0.0
        %571 = vmatpush1.xpose.msra.mxu0 0.0
        %572 = vmatprep.subr.mxu0 0.0
        %573 = vmatpush1.xpose.msra.mxu0 0.0
        %574 = vmatprep.subr.mxu0 0.0
        %575 = vmatpush1.xpose.msra.mxu0 0.0
        %576 = vmatprep.subr.mxu0 0.0
        %577 = vmatpush1.xpose.msra.mxu0 0.0
        %578 = vmatprep.subr.mxu0 0.0
        %579 = vmatpush1.xpose.msra.mxu0 0.0
        %580 = vmatprep.subr.mxu0 0.0
        %581 = vmatpush1.xpose.msra.mxu0 0.0
        %582 = vmatprep.subr.mxu0 0.0
        %583 = vmatpush1.xpose.msra.mxu0 0.0
        %584 = vmatprep.subr.mxu0 0.0
        %585 = vmatpush1.xpose.msra.mxu0 0.0
        %586 = vmatprep.subr.mxu0 0.0
        %587 = vmatpush1.xpose.msra.mxu0 0.0
        %588 = vmatprep.subr.mxu0 0.0
        %589 = vmatpush1.xpose.msra.mxu0 0.0
        %590 = vmatprep.subr.mxu0 0.0
        %591 = vmatpush1.xpose.msra.mxu0 0.0
        %592 = vmatprep.subr.mxu0 0.0
        %593 = vmatpush1.xpose.msra.mxu0 0.0
        %594 = vmatprep.mubr.f32.mxu0 0.0
        %595 = vmatmul.mubr.f32.gmra.mrb[0].mxu0 %v526
        %v596 = vpop.f32.mrb[0].mxu0
        %v597 = vadd.f32 0.0, %v596
        %v598 = vpop.f32.mrb[0].mxu0
        %599 = vdwg.mxu0
        %v600 = vmul.f32 %v597, 0.35355338
        %v601 = vsel %vm525, %v600, -inf
        %602 = vmax.xlane.f32.xlu0 %v601
        %v603 = vpop.xlane.xlu0 %602
        %v604 = vsub.f32 %v600, %v603
        %v605 = vmul.f32 %v604, 1.442695
        %v606 = vpow.pop %v605
        %v607 = vsel %vm525, %v606, 0.0
        %608 = vadd.xlane.f32.xlu0 %v607
        %v609 = vpop.xlane.xlu0 %608
        %v610 = vrcp.pop %v609
        %v611 = vmul.f32 %v606, %v610
        %612 = vrot.lane.b32.xlu0 %v519, 64
        %v613 = vpop.permute.xlu0 %612
        %v616 = vsel %vm525, %v611, 0
        %618 = vmatprep.subr.mxu0 0.0
        %619 = vmatpush1.msra.mxu0 %v613
        %620 = vmatprep.subr.mxu0 0.0
        %621 = vmatpush1.msra.mxu0 0.0
        %622 = vmatprep.subr.mxu0 0.0
        %623 = vmatpush1.msra.mxu0 0.0
        %624 = vmatprep.subr.mxu0 0.0
        %625 = vmatpush1.msra.mxu0 0.0
        %626 = vmatprep.subr.mxu0 0.0
        %627 = vmatpush1.msra.mxu0 0.0
        %628 = vmatprep.subr.mxu0 0.0
        %629 = vmatpush1.msra.mxu0 0.0
        %630 = vmatprep.subr.mxu0 0.0
        %631 = vmatpush1.msra.mxu0 0.0
        %632 = vmatprep.subr.mxu0 0.0
        %633 = vmatpush1.msra.mxu0 0.0
        %634 = vmatprep.subr.mxu0 0.0
        %635 = vmatpush1.msra.mxu0 0.0
        %636 = vmatprep.subr.mxu0 0.0
        %637 = vmatpush1.msra.mxu0 0.0
        %638 = vmatprep.subr.mxu0 0.0
        %639 = vmatpush1.msra.mxu0 0.0
        %640 = vmatprep.subr.mxu0 0.0
        %641 = vmatpush1.msra.mxu0 0.0
        %642 = vmatprep.subr.mxu0 0.0
        %643 = vmatpush1.msra.mxu0 0.0
        %644 = vmatprep.subr.mxu0 0.0
        %645 = vmatpush1.msra.mxu0 0.0
        %646 = vmatprep.subr.mxu0 0.0
        %647 = vmatpush1.msra.mxu0 0.0
        %648 = vmatprep.subr.mxu0 0.0
        %649 = vmatpush1.msra.mxu0 0.0
        %650 = vmatprep.subr.mxu0 0.0
        %651 = vmatpush1.msra.mxu0 0.0
        %652 = vmatprep.subr.mxu0 0.0
        %653 = vmatpush1.msra.mxu0 0.0
        %654 = vmatprep.subr.mxu0 0.0
        %655 = vmatpush1.msra.mxu0 0.0
        %656 = vmatprep.subr.mxu0 0.0
        %657 = vmatpush1.msra.mxu0 0.0
        %658 = vmatprep.subr.mxu0 0.0
        %659 = vmatpush1.msra.mxu0 0.0
        %660 = vmatprep.subr.mxu0 0.0
        %661 = vmatpush1.msra.mxu0 0.0
        %662 = vmatprep.subr.mxu0 0.0
        %663 = vmatpush1.msra.mxu0 0.0
        %664 = vmatprep.subr.mxu0 0.0
        %665 = vmatpush1.msra.mxu0 0.0
        %666 = vmatprep.subr.mxu0 0.0
        %667 = vmatpush1.msra.mxu0 0.0
        %668 = vmatprep.subr.mxu0 0.0
        %669 = vmatpush1.msra.mxu0 0.0
        %670 = vmatprep.subr.mxu0 0.0
        %671 = vmatpush1.msra.mxu0 0.0
        %672 = vmatprep.subr.mxu0 0.0
        %673 = vmatpush1.msra.mxu0 0.0
        %674 = vmatprep.subr.mxu0 0.0
        %675 = vmatpush1.msra.mxu0 0.0
        %676 = vmatprep.subr.mxu0 0.0
        %677 = vmatpush1.msra.mxu0 0.0
        %678 = vmatprep.subr.mxu0 0.0
        %679 = vmatpush1.msra.mxu0 0.0
        %680 = vmatprep.subr.mxu0 0.0
        %681 = vmatpush1.msra.mxu0 0.0
        %682 = vmatprep.mubr.f32.mxu0 0.0
        %683 = vmatmul.mubr.f32.gmra.mrb[0].mxu0 %v616
        %v684 = vpop.f32.mrb[0].mxu0
        %v685 = vadd.f32 0.0, %v684
        %v686 = vpop.f32.mrb[0].mxu0
        %687 = vdwg.mxu0
        %v688 = vld [vmem:[%s3] sm:$0xff]
        %689 = vrot.lane.b32.xlu0 %v519, 120
        %v690 = vpop.permute.xlu0 %689
        %691 = vrot.lane.b32.xlu0 %v519, 88
        %v692 = vpop.permute.xlu0 %691
        %v693 = vsel %vm525, %v690, 0
        %v695 = vsel %vm525, %v692, 0
        %697 = vmatprep.subr.mxu0 0.0
        %698 = vmatpush1.xpose.msra.mxu0 %v695
        %699 = vmatprep.subr.mxu0 0.0
        %700 = vmatpush1.xpose.msra.mxu0 0.0
        %701 = vmatprep.subr.mxu0 0.0
        %702 = vmatpush1.xpose.msra.mxu0 0.0
        %703 = vmatprep.subr.mxu0 0.0
        %704 = vmatpush1.xpose.msra.mxu0 0.0
        %705 = vmatprep.subr.mxu0 0.0
        %706 = vmatpush1.xpose.msra.mxu0 0.0
        %707 = vmatprep.subr.mxu0 0.0
        %708 = vmatpush1.xpose.msra.mxu0 0.0
        %709 = vmatprep.subr.mxu0 0.0
        %710 = vmatpush1.xpose.msra.mxu0 0.0
        %711 = vmatprep.subr.mxu0 0.0
        %712 = vmatpush1.xpose.msra.mxu0 0.0
        %713 = vmatprep.subr.mxu0 0.0
        %714 = vmatpush1.xpose.msra.mxu0 0.0
        %715 = vmatprep.subr.mxu0 0.0
        %716 = vmatpush1.xpose.msra.mxu0 0.0
        %717 = vmatprep.subr.mxu0 0.0
        %718 = vmatpush1.xpose.msra.mxu0 0.0
        %719 = vmatprep.subr.mxu0 0.0
        %720 = vmatpush1.xpose.msra.mxu0 0.0
        %721 = vmatprep.subr.mxu0 0.0
        %722 = vmatpush1.xpose.msra.mxu0 0.0
        %723 = vmatprep.subr.mxu0 0.0
        %724 = vmatpush1.xpose.msra.mxu0 0.0
        %725 = vmatprep.subr.mxu0 0.0
        %726 = vmatpush1.xpose.msra.mxu0 0.0
        %727 = vmatprep.subr.mxu0 0.0
        %728 = vmatpush1.xpose.msra.mxu0 0.0
        %729 = vmatprep.subr.mxu0 0.0
        %730 = vmatpush1.xpose.msra.mxu0 0.0
        %731 = vmatprep.subr.mxu0 0.0
        %732 = vmatpush1.xpose.msra.mxu0 0.0
        %733 = vmatprep.subr.mxu0 0.0
        %734 = vmatpush1.xpose.msra.mxu0 0.0
        %735 = vmatprep.subr.mxu0 0.0
        %736 = vmatpush1.xpose.msra.mxu0 0.0
        %737 = vmatprep.subr.mxu0 0.0
        %738 = vmatpush1.xpose.msra.mxu0 0.0
        %739 = vmatprep.subr.mxu0 0.0
        %740 = vmatpush1.xpose.msra.mxu0 0.0
        %741 = vmatprep.subr.mxu0 0.0
        %742 = vmatpush1.xpose.msra.mxu0 0.0
        %743 = vmatprep.subr.mxu0 0.0
        %744 = vmatpush1.xpose.msra.mxu0 0.0
        %745 = vmatprep.subr.mxu0 0.0
        %746 = vmatpush1.xpose.msra.mxu0 0.0
        %747 = vmatprep.subr.mxu0 0.0
        %748 = vmatpush1.xpose.msra.mxu0 0.0
        %749 = vmatprep.subr.mxu0 0.0
        %750 = vmatpush1.xpose.msra.mxu0 0.0
        %751 = vmatprep.subr.mxu0 0.0
        %752 = vmatpush1.xpose.msra.mxu0 0.0
        %753 = vmatprep.subr.mxu0 0.0
        %754 = vmatpush1.xpose.msra.mxu0 0.0
        %755 = vmatprep.subr.mxu0 0.0
        %756 = vmatpush1.xpose.msra.mxu0 0.0
        %757 = vmatprep.subr.mxu0 0.0
        %758 = vmatpush1.xpose.msra.mxu0 0.0
        %759 = vmatprep.subr.mxu0 0.0
        %760 = vmatpush1.xpose.msra.mxu0 0.0
        %761 = vmatprep.mubr.f32.mxu0 0.0
        %762 = vmatmul.mubr.f32.gmra.mrb[0].mxu0 %v693
        %v763 = vpop.f32.mrb[0].mxu0
        %v764 = vadd.f32 0.0, %v763
        %v765 = vpop.f32.mrb[0].mxu0
        %766 = vdwg.mxu0
        %v767 = vmul.f32 %v764, 0.35355338
        %v768 = vsel %vm525, %v767, -inf
        %769 = vmax.xlane.f32.xlu0 %v768
        %v770 = vpop.xlane.xlu0 %769
        %v771 = vsub.f32 %v767, %v770
        %v772 = vmul.f32 %v771, 1.442695
        %v773 = vpow.pop %v772
        %v774 = vsel %vm525, %v773, 0.0
        %775 = vadd.xlane.f32.xlu0 %v774
        %v776 = vpop.xlane.xlu0 %775
        %v777 = vrcp.pop %v776
        %v778 = vmul.f32 %v773, %v777
        %779 = vrot.lane.b32.xlu0 %v519, 56
        %v780 = vpop.permute.xlu0 %779
        %v783 = vsel %vm525, %v778, 0
        %785 = vmatprep.subr.mxu0 0.0
        %786 = vmatpush1.msra.mxu0 %v780
        %787 = vmatprep.subr.mxu0 0.0
        %788 = vmatpush1.msra.mxu0 0.0
        %789 = vmatprep.subr.mxu0 0.0
        %790 = vmatpush1.msra.mxu0 0.0
        %791 = vmatprep.subr.mxu0 0.0
        %792 = vmatpush1.msra.mxu0 0.0
        %793 = vmatprep.subr.mxu0 0.0
        %794 = vmatpush1.msra.mxu0 0.0
        %795 = vmatprep.subr.mxu0 0.0
        %796 = vmatpush1.msra.mxu0 0.0
        %797 = vmatprep.subr.mxu0 0.0
        %798 = vmatpush1.msra.mxu0 0.0
        %799 = vmatprep.subr.mxu0 0.0
        %800 = vmatpush1.msra.mxu0 0.0
        %801 = vmatprep.subr.mxu0 0.0
        %802 = vmatpush1.msra.mxu0 0.0
        %803 = vmatprep.subr.mxu0 0.0
        %804 = vmatpush1.msra.mxu0 0.0
        %805 = vmatprep.subr.mxu0 0.0
        %806 = vmatpush1.msra.mxu0 0.0
        %807 = vmatprep.subr.mxu0 0.0
        %808 = vmatpush1.msra.mxu0 0.0
        %809 = vmatprep.subr.mxu0 0.0
        %810 = vmatpush1.msra.mxu0 0.0
        %811 = vmatprep.subr.mxu0 0.0
        %812 = vmatpush1.msra.mxu0 0.0
        %813 = vmatprep.subr.mxu0 0.0
        %814 = vmatpush1.msra.mxu0 0.0
        %815 = vmatprep.subr.mxu0 0.0
        %816 = vmatpush1.msra.mxu0 0.0
        %817 = vmatprep.subr.mxu0 0.0
        %818 = vmatpush1.msra.mxu0 0.0
        %819 = vmatprep.subr.mxu0 0.0
        %820 = vmatpush1.msra.mxu0 0.0
        %821 = vmatprep.subr.mxu0 0.0
        %822 = vmatpush1.msra.mxu0 0.0
        %823 = vmatprep.subr.mxu0 0.0
        %824 = vmatpush1.msra.mxu0 0.0
        %825 = vmatprep.subr.mxu0 0.0
        %826 = vmatpush1.msra.mxu0 0.0
        %827 = vmatprep.subr.mxu0 0.0
        %828 = vmatpush1.msra.mxu0 0.0
        %829 = vmatprep.subr.mxu0 0.0
        %830 = vmatpush1.msra.mxu0 0.0
        %831 = vmatprep.subr.mxu0 0.0
        %832 = vmatpush1.msra.mxu0 0.0
        %833 = vmatprep.subr.mxu0 0.0
        %834 = vmatpush1.msra.mxu0 0.0
        %835 = vmatprep.subr.mxu0 0.0
        %836 = vmatpush1.msra.mxu0 0.0
        %837 = vmatprep.subr.mxu0 0.0
        %838 = vmatpush1.msra.mxu0 0.0
        %839 = vmatprep.subr.mxu0 0.0
        %840 = vmatpush1.msra.mxu0 0.0
        %841 = vmatprep.subr.mxu0 0.0
        %842 = vmatpush1.msra.mxu0 0.0
        %843 = vmatprep.subr.mxu0 0.0
        %844 = vmatpush1.msra.mxu0 0.0
        %845 = vmatprep.subr.mxu0 0.0
        %846 = vmatpush1.msra.mxu0 0.0
        %847 = vmatprep.subr.mxu0 0.0
        %848 = vmatpush1.msra.mxu0 0.0
        %849 = vmatprep.mubr.f32.mxu0 0.0
        %850 = vmatmul.mubr.f32.gmra.mrb[0].mxu0 %v783
        %v851 = vpop.f32.mrb[0].mxu0
        %v852 = vadd.f32 0.0, %v851
        %v853 = vpop.f32.mrb[0].mxu0
        %854 = vdwg.mxu0
        %v855 = vld [vmem:[%s3 + $0x8] sm:$0xff]
        %v857 = vsel %vm525, %v852, 0
        %859 = vmatprep.subr.mxu0 0.0
        %860 = vmatpush1.msra.mxu0 %v855
        %861 = vmatprep.subr.mxu0 0.0
        %862 = vmatpush1.msra.mxu0 0.0
        %863 = vmatprep.subr.mxu0 0.0
        %864 = vmatpush1.msra.mxu0 0.0
        %865 = vmatprep.subr.mxu0 0.0
        %866 = vmatpush1.msra.mxu0 0.0
        %867 = vmatprep.subr.mxu0 0.0
        %868 = vmatpush1.msra.mxu0 0.0
        %869 = vmatprep.subr.mxu0 0.0
        %870 = vmatpush1.msra.mxu0 0.0
        %871 = vmatprep.subr.mxu0 0.0
        %872 = vmatpush1.msra.mxu0 0.0
        %873 = vmatprep.subr.mxu0 0.0
        %874 = vmatpush1.msra.mxu0 0.0
        %875 = vmatprep.subr.mxu0 0.0
        %876 = vmatpush1.msra.mxu0 0.0
        %877 = vmatprep.subr.mxu0 0.0
        %878 = vmatpush1.msra.mxu0 0.0
        %879 = vmatprep.subr.mxu0 0.0
        %880 = vmatpush1.msra.mxu0 0.0
        %881 = vmatprep.subr.mxu0 0.0
        %882 = vmatpush1.msra.mxu0 0.0
        %883 = vmatprep.subr.mxu0 0.0
        %884 = vmatpush1.msra.mxu0 0.0
        %885 = vmatprep.subr.mxu0 0.0
        %886 = vmatpush1.msra.mxu0 0.0
        %887 = vmatprep.subr.mxu0 0.0
        %888 = vmatpush1.msra.mxu0 0.0
        %889 = vmatprep.subr.mxu0 0.0
        %890 = vmatpush1.msra.mxu0 0.0
        %891 = vmatprep.subr.mxu0 0.0
        %892 = vmatpush1.msra.mxu0 0.0
        %893 = vmatprep.subr.mxu0 0.0
        %894 = vmatpush1.msra.mxu0 0.0
        %895 = vmatprep.subr.mxu0 0.0
        %896 = vmatpush1.msra.mxu0 0.0
        %897 = vmatprep.subr.mxu0 0.0
        %898 = vmatpush1.msra.mxu0 0.0
        %899 = vmatprep.subr.mxu0 0.0
        %900 = vmatpush1.msra.mxu0 0.0
        %901 = vmatprep.subr.mxu0 0.0
        %902 = vmatpush1.msra.mxu0 0.0
        %903 = vmatprep.subr.mxu0 0.0
        %904 = vmatpush1.msra.mxu0 0.0
        %905 = vmatprep.subr.mxu0 0.0
        %906 = vmatpush1.msra.mxu0 0.0
        %907 = vmatprep.subr.mxu0 0.0
        %908 = vmatpush1.msra.mxu0 0.0
        %909 = vmatprep.subr.mxu0 0.0
        %910 = vmatpush1.msra.mxu0 0.0
        %911 = vmatprep.subr.mxu0 0.0
        %912 = vmatpush1.msra.mxu0 0.0
        %913 = vmatprep.subr.mxu0 0.0
        %914 = vmatpush1.msra.mxu0 0.0
        %915 = vmatprep.subr.mxu0 0.0
        %916 = vmatpush1.msra.mxu0 0.0
        %917 = vmatprep.subr.mxu0 0.0
        %918 = vmatpush1.msra.mxu0 0.0
        %919 = vmatprep.subr.mxu0 0.0
        %920 = vmatpush1.msra.mxu0 0.0
        %921 = vmatprep.subr.mxu0 0.0
        %922 = vmatpush1.msra.mxu0 0.0
        %923 = vmatprep.mubr.f32.mxu0 0.0
        %924 = vmatmul.mubr.f32.gmra.mrb[0].mxu0 %v857
        %v925 = vpop.f32.mrb[0].mxu0
        %v926 = vadd.f32 0.0, %v925
        %v927 = vpop.f32.mrb[0].mxu0
        %928 = vdwg.mxu0
        %v930 = vsel %vm525, %v685, 0
        %932 = vmatprep.subr.mxu0 0.0
        %933 = vmatpush1.msra.mxu0 %v688
        %934 = vmatprep.subr.mxu0 0.0
        %935 = vmatpush1.msra.mxu0 0.0
        %936 = vmatprep.subr.mxu0 0.0
        %937 = vmatpush1.msra.mxu0 0.0
        %938 = vmatprep.subr.mxu0 0.0
        %939 = vmatpush1.msra.mxu0 0.0
        %940 = vmatprep.subr.mxu0 0.0
        %941 = vmatpush1.msra.mxu0 0.0
        %942 = vmatprep.subr.mxu0 0.0
        %943 = vmatpush1.msra.mxu0 0.0
        %944 = vmatprep.subr.mxu0 0.0
        %945 = vmatpush1.msra.mxu0 0.0
        %946 = vmatprep.subr.mxu0 0.0
        %947 = vmatpush1.msra.mxu0 0.0
        %948 = vmatprep.subr.mxu0 0.0
        %949 = vmatpush1.msra.mxu0 0.0
        %950 = vmatprep.subr.mxu0 0.0
        %951 = vmatpush1.msra.mxu0 0.0
        %952 = vmatprep.subr.mxu0 0.0
        %953 = vmatpush1.msra.mxu0 0.0
        %954 = vmatprep.subr.mxu0 0.0
        %955 = vmatpush1.msra.mxu0 0.0
        %956 = vmatprep.subr.mxu0 0.0
        %957 = vmatpush1.msra.mxu0 0.0
        %958 = vmatprep.subr.mxu0 0.0
        %959 = vmatpush1.msra.mxu0 0.0
        %960 = vmatprep.subr.mxu0 0.0
        %961 = vmatpush1.msra.mxu0 0.0
        %962 = vmatprep.subr.mxu0 0.0
        %963 = vmatpush1.msra.mxu0 0.0
        %964 = vmatprep.subr.mxu0 0.0
        %965 = vmatpush1.msra.mxu0 0.0
        %966 = vmatprep.subr.mxu0 0.0
        %967 = vmatpush1.msra.mxu0 0.0
        %968 = vmatprep.subr.mxu0 0.0
        %969 = vmatpush1.msra.mxu0 0.0
        %970 = vmatprep.subr.mxu0 0.0
        %971 = vmatpush1.msra.mxu0 0.0
        %972 = vmatprep.subr.mxu0 0.0
        %973 = vmatpush1.msra.mxu0 0.0
        %974 = vmatprep.subr.mxu0 0.0
        %975 = vmatpush1.msra.mxu0 0.0
        %976 = vmatprep.subr.mxu0 0.0
        %977 = vmatpush1.msra.mxu0 0.0
        %978 = vmatprep.subr.mxu0 0.0
        %979 = vmatpush1.msra.mxu0 0.0
        %980 = vmatprep.subr.mxu0 0.0
        %981 = vmatpush1.msra.mxu0 0.0
        %982 = vmatprep.subr.mxu0 0.0
        %983 = vmatpush1.msra.mxu0 0.0
        %984 = vmatprep.subr.mxu0 0.0
        %985 = vmatpush1.msra.mxu0 0.0
        %986 = vmatprep.subr.mxu0 0.0
        %987 = vmatpush1.msra.mxu0 0.0
        %988 = vmatprep.subr.mxu0 0.0
        %989 = vmatpush1.msra.mxu0 0.0
        %990 = vmatprep.subr.mxu0 0.0
        %991 = vmatpush1.msra.mxu0 0.0
        %992 = vmatprep.subr.mxu0 0.0
        %993 = vmatpush1.msra.mxu0 0.0
        %994 = vmatprep.subr.mxu0 0.0
        %995 = vmatpush1.msra.mxu0 0.0
        %996 = vmatprep.mubr.f32.mxu0 0.0
        %997 = vmatmul.mubr.f32.gmra.mrb[0].mxu0 %v930
        %v998 = vpop.f32.mrb[0].mxu0
        %v999 = vadd.f32 %v926, %v998
        %v1000 = vpop.f32.mrb[0].mxu0
        %1001 = vdwg.mxu0
        %1002 = vrot.lane.b32.xlu0 %v519, 112
        %v1003 = vpop.permute.xlu0 %1002
        %1004 = vrot.lane.b32.xlu0 %v519, 80
        %v1005 = vpop.permute.xlu0 %1004
        %v1006 = vsel %vm525, %v1003, 0
        %v1008 = vsel %vm525, %v1005, 0
        %1010 = vmatprep.subr.mxu0 0.0
        %1011 = vmatpush1.xpose.msra.mxu0 %v1008
        %1012 = vmatprep.subr.mxu0 0.0
        %1013 = vmatpush1.xpose.msra.mxu0 0.0
        %1014 = vmatprep.subr.mxu0 0.0
        %1015 = vmatpush1.xpose.msra.mxu0 0.0
        %1016 = vmatprep.subr.mxu0 0.0
        %1017 = vmatpush1.xpose.msra.mxu0 0.0
        %1018 = vmatprep.subr.mxu0 0.0
        %1019 = vmatpush1.xpose.msra.mxu0 0.0
        %1020 = vmatprep.subr.mxu0 0.0
        %1021 = vmatpush1.xpose.msra.mxu0 0.0
        %1022 = vmatprep.subr.mxu0 0.0
        %1023 = vmatpush1.xpose.msra.mxu0 0.0
        %1024 = vmatprep.subr.mxu0 0.0
        %1025 = vmatpush1.xpose.msra.mxu0 0.0
        %1026 = vmatprep.subr.mxu0 0.0
        %1027 = vmatpush1.xpose.msra.mxu0 0.0
        %1028 = vmatprep.subr.mxu0 0.0
        %1029 = vmatpush1.xpose.msra.mxu0 0.0
        %1030 = vmatprep.subr.mxu0 0.0
        %1031 = vmatpush1.xpose.msra.mxu0 0.0
        %1032 = vmatprep.subr.mxu0 0.0
        %1033 = vmatpush1.xpose.msra.mxu0 0.0
        %1034 = vmatprep.subr.mxu0 0.0
        %1035 = vmatpush1.xpose.msra.mxu0 0.0
        %1036 = vmatprep.subr.mxu0 0.0
        %1037 = vmatpush1.xpose.msra.mxu0 0.0
        %1038 = vmatprep.subr.mxu0 0.0
        %1039 = vmatpush1.xpose.msra.mxu0 0.0
        %1040 = vmatprep.subr.mxu0 0.0
        %1041 = vmatpush1.xpose.msra.mxu0 0.0
        %1042 = vmatprep.subr.mxu0 0.0
        %1043 = vmatpush1.xpose.msra.mxu0 0.0
        %1044 = vmatprep.subr.mxu0 0.0
        %1045 = vmatpush1.xpose.msra.mxu0 0.0
        %1046 = vmatprep.subr.mxu0 0.0
        %1047 = vmatpush1.xpose.msra.mxu0 0.0
        %1048 = vmatprep.subr.mxu0 0.0
        %1049 = vmatpush1.xpose.msra.mxu0 0.0
        %1050 = vmatprep.subr.mxu0 0.0
        %1051 = vmatpush1.xpose.msra.mxu0 0.0
        %1052 = vmatprep.subr.mxu0 0.0
        %1053 = vmatpush1.xpose.msra.mxu0 0.0
        %1054 = vmatprep.subr.mxu0 0.0
        %1055 = vmatpush1.xpose.msra.mxu0 0.0
        %1056 = vmatprep.subr.mxu0 0.0
        %1057 = vmatpush1.xpose.msra.mxu0 0.0
        %1058 = vmatprep.subr.mxu0 0.0
        %1059 = vmatpush1.xpose.msra.mxu0 0.0
        %1060 = vmatprep.subr.mxu0 0.0
        %1061 = vmatpush1.xpose.msra.mxu0 0.0
        %1062 = vmatprep.subr.mxu0 0.0
        %1063 = vmatpush1.xpose.msra.mxu0 0.0
        %1064 = vmatprep.subr.mxu0 0.0
        %1065 = vmatpush1.xpose.msra.mxu0 0.0
        %1066 = vmatprep.subr.mxu0 0.0
        %1067 = vmatpush1.xpose.msra.mxu0 0.0
        %1068 = vmatprep.subr.mxu0 0.0
        %1069 = vmatpush1.xpose.msra.mxu0 0.0
        %1070 = vmatprep.subr.mxu0 0.0
        %1071 = vmatpush1.xpose.msra.mxu0 0.0
        %1072 = vmatprep.subr.mxu0 0.0
        %1073 = vmatpush1.xpose.msra.mxu0 0.0
        %1074 = vmatprep.mubr.f32.mxu0 0.0
        %1075 = vmatmul.mubr.f32.gmra.mrb[0].mxu0 %v1006
        %v1076 = vpop.f32.mrb[0].mxu0
        %v1077 = vadd.f32 0.0, %v1076
        %v1078 = vpop.f32.mrb[0].mxu0
        %1079 = vdwg.mxu0
        %v1080 = vmul.f32 %v1077, 0.35355338
        %v1081 = vsel %vm525, %v1080, -inf
        %1082 = vmax.xlane.f32.xlu0 %v1081
        %v1083 = vpop.xlane.xlu0 %1082
        %v1084 = vsub.f32 %v1080, %v1083
        %v1085 = vmul.f32 %v1084, 1.442695
        %v1086 = vpow.pop %v1085
        %v1087 = vsel %vm525, %v1086, 0.0
        %1088 = vadd.xlane.f32.xlu0 %v1087
        %v1089 = vpop.xlane.xlu0 %1088
        %v1090 = vrcp.pop %v1089
        %v1091 = vmul.f32 %v1086, %v1090
        %1092 = vrot.lane.b32.xlu0 %v519, 48
        %v1093 = vpop.permute.xlu0 %1092
        %v1096 = vsel %vm525, %v1091, 0
        %1098 = vmatprep.subr.mxu0 0.0
        %1099 = vmatpush1.msra.mxu0 %v1093
        %1100 = vmatprep.subr.mxu0 0.0
        %1101 = vmatpush1.msra.mxu0 0.0
        %1102 = vmatprep.subr.mxu0 0.0
        %1103 = vmatpush1.msra.mxu0 0.0
        %1104 = vmatprep.subr.mxu0 0.0
        %1105 = vmatpush1.msra.mxu0 0.0
        %1106 = vmatprep.subr.mxu0 0.0
        %1107 = vmatpush1.msra.mxu0 0.0
        %1108 = vmatprep.subr.mxu0 0.0
        %1109 = vmatpush1.msra.mxu0 0.0
        %1110 = vmatprep.subr.mxu0 0.0
        %1111 = vmatpush1.msra.mxu0 0.0
        %1112 = vmatprep.subr.mxu0 0.0
        %1113 = vmatpush1.msra.mxu0 0.0
        %1114 = vmatprep.subr.mxu0 0.0
        %1115 = vmatpush1.msra.mxu0 0.0
        %1116 = vmatprep.subr.mxu0 0.0
        %1117 = vmatpush1.msra.mxu0 0.0
        %1118 = vmatprep.subr.mxu0 0.0
        %1119 = vmatpush1.msra.mxu0 0.0
        %1120 = vmatprep.subr.mxu0 0.0
        %1121 = vmatpush1.msra.mxu0 0.0
        %1122 = vmatprep.subr.mxu0 0.0
        %1123 = vmatpush1.msra.mxu0 0.0
        %1124 = vmatprep.subr.mxu0 0.0
        %1125 = vmatpush1.msra.mxu0 0.0
        %1126 = vmatprep.subr.mxu0 0.0
        %1127 = vmatpush1.msra.mxu0 0.0
        %1128 = vmatprep.subr.mxu0 0.0
        %1129 = vmatpush1.msra.mxu0 0.0
        %1130 = vmatprep.subr.mxu0 0.0
        %1131 = vmatpush1.msra.mxu0 0.0
        %1132 = vmatprep.subr.mxu0 0.0
        %1133 = vmatpush1.msra.mxu0 0.0
        %1134 = vmatprep.subr.mxu0 0.0
        %1135 = vmatpush1.msra.mxu0 0.0
        %1136 = vmatprep.subr.mxu0 0.0
        %1137 = vmatpush1.msra.mxu0 0.0
        %1138 = vmatprep.subr.mxu0 0.0
        %1139 = vmatpush1.msra.mxu0 0.0
        %1140 = vmatprep.subr.mxu0 0.0
        %1141 = vmatpush1.msra.mxu0 0.0
        %1142 = vmatprep.subr.mxu0 0.0
        %1143 = vmatpush1.msra.mxu0 0.0
        %1144 = vmatprep.subr.mxu0 0.0
        %1145 = vmatpush1.msra.mxu0 0.0
        %1146 = vmatprep.subr.mxu0 0.0
        %1147 = vmatpush1.msra.mxu0 0.0
        %1148 = vmatprep.subr.mxu0 0.0
        %1149 = vmatpush1.msra.mxu0 0.0
        %1150 = vmatprep.subr.mxu0 0.0
        %1151 = vmatpush1.msra.mxu0 0.0
        %1152 = vmatprep.subr.mxu0 0.0
        %1153 = vmatpush1.msra.mxu0 0.0
        %1154 = vmatprep.subr.mxu0 0.0
        %1155 = vmatpush1.msra.mxu0 0.0
        %1156 = vmatprep.subr.mxu0 0.0
        %1157 = vmatpush1.msra.mxu0 0.0
        %1158 = vmatprep.subr.mxu0 0.0
        %1159 = vmatpush1.msra.mxu0 0.0
        %1160 = vmatprep.subr.mxu0 0.0
        %1161 = vmatpush1.msra.mxu0 0.0
        %1162 = vmatprep.mubr.f32.mxu0 0.0
        %1163 = vmatmul.mubr.f32.gmra.mrb[0].mxu0 %v1096
        %v1164 = vpop.f32.mrb[0].mxu0
        %v1165 = vadd.f32 0.0, %v1164
        %v1166 = vpop.f32.mrb[0].mxu0
        %1167 = vdwg.mxu0
        %v1168 = vld [vmem:[%s3 + $0x10] sm:$0xff]
        %v1170 = vsel %vm525, %v1165, 0
        %1172 = vmatprep.subr.mxu0 0.0
        %1173 = vmatpush1.msra.mxu0 %v1168
        %1174 = vmatprep.subr.mxu0 0.0
        %1175 = vmatpush1.msra.mxu0 0.0
        %1176 = vmatprep.subr.mxu0 0.0
        %1177 = vmatpush1.msra.mxu0 0.0
        %1178 = vmatprep.subr.mxu0 0.0
        %1179 = vmatpush1.msra.mxu0 0.0
        %1180 = vmatprep.subr.mxu0 0.0
        %1181 = vmatpush1.msra.mxu0 0.0
        %1182 = vmatprep.subr.mxu0 0.0
        %1183 = vmatpush1.msra.mxu0 0.0
        %1184 = vmatprep.subr.mxu0 0.0
        %1185 = vmatpush1.msra.mxu0 0.0
        %1186 = vmatprep.subr.mxu0 0.0
        %1187 = vmatpush1.msra.mxu0 0.0
        %1188 = vmatprep.subr.mxu0 0.0
        %1189 = vmatpush1.msra.mxu0 0.0
        %1190 = vmatprep.subr.mxu0 0.0
        %1191 = vmatpush1.msra.mxu0 0.0
        %1192 = vmatprep.subr.mxu0 0.0
        %1193 = vmatpush1.msra.mxu0 0.0
        %1194 = vmatprep.subr.mxu0 0.0
        %1195 = vmatpush1.msra.mxu0 0.0
        %1196 = vmatprep.subr.mxu0 0.0
        %1197 = vmatpush1.msra.mxu0 0.0
        %1198 = vmatprep.subr.mxu0 0.0
        %1199 = vmatpush1.msra.mxu0 0.0
        %1200 = vmatprep.subr.mxu0 0.0
        %1201 = vmatpush1.msra.mxu0 0.0
        %1202 = vmatprep.subr.mxu0 0.0
        %1203 = vmatpush1.msra.mxu0 0.0
        %1204 = vmatprep.subr.mxu0 0.0
        %1205 = vmatpush1.msra.mxu0 0.0
        %1206 = vmatprep.subr.mxu0 0.0
        %1207 = vmatpush1.msra.mxu0 0.0
        %1208 = vmatprep.subr.mxu0 0.0
        %1209 = vmatpush1.msra.mxu0 0.0
        %1210 = vmatprep.subr.mxu0 0.0
        %1211 = vmatpush1.msra.mxu0 0.0
        %1212 = vmatprep.subr.mxu0 0.0
        %1213 = vmatpush1.msra.mxu0 0.0
        %1214 = vmatprep.subr.mxu0 0.0
        %1215 = vmatpush1.msra.mxu0 0.0
        %1216 = vmatprep.subr.mxu0 0.0
        %1217 = vmatpush1.msra.mxu0 0.0
        %1218 = vmatprep.subr.mxu0 0.0
        %1219 = vmatpush1.msra.mxu0 0.0
        %1220 = vmatprep.subr.mxu0 0.0
        %1221 = vmatpush1.msra.mxu0 0.0
        %1222 = vmatprep.subr.mxu0 0.0
        %1223 = vmatpush1.msra.mxu0 0.0
        %1224 = vmatprep.subr.mxu0 0.0
        %1225 = vmatpush1.msra.mxu0 0.0
        %1226 = vmatprep.subr.mxu0 0.0
        %1227 = vmatpush1.msra.mxu0 0.0
        %1228 = vmatprep.subr.mxu0 0.0
        %1229 = vmatpush1.msra.mxu0 0.0
        %1230 = vmatprep.subr.mxu0 0.0
        %1231 = vmatpush1.msra.mxu0 0.0
        %1232 = vmatprep.subr.mxu0 0.0
        %1233 = vmatpush1.msra.mxu0 0.0
        %1234 = vmatprep.subr.mxu0 0.0
        %1235 = vmatpush1.msra.mxu0 0.0
        %1236 = vmatprep.mubr.f32.mxu0 0.0
        %1237 = vmatmul.mubr.f32.gmra.mrb[0].mxu0 %v1170
        %v1238 = vpop.f32.mrb[0].mxu0
        %v1239 = vadd.f32 0.0, %v1238
        %v1240 = vpop.f32.mrb[0].mxu0
        %1241 = vdwg.mxu0
        %v1242 = vadd.f32 %v999, %v1239
        %1243 = vrot.lane.b32.xlu0 %v519, 104
        %v1244 = vpop.permute.xlu0 %1243
        %1245 = vrot.lane.b32.xlu0 %v519, 72
        %v1246 = vpop.permute.xlu0 %1245
        %v1247 = vsel %vm525, %v1244, 0
        %v1249 = vsel %vm525, %v1246, 0
        %1251 = vmatprep.subr.mxu0 0.0
        %1252 = vmatpush1.xpose.msra.mxu0 %v1249
        %1253 = vmatprep.subr.mxu0 0.0
        %1254 = vmatpush1.xpose.msra.mxu0 0.0
        %1255 = vmatprep.subr.mxu0 0.0
        %1256 = vmatpush1.xpose.msra.mxu0 0.0
        %1257 = vmatprep.subr.mxu0 0.0
        %1258 = vmatpush1.xpose.msra.mxu0 0.0
        %1259 = vmatprep.subr.mxu0 0.0
        %1260 = vmatpush1.xpose.msra.mxu0 0.0
        %1261 = vmatprep.subr.mxu0 0.0
        %1262 = vmatpush1.xpose.msra.mxu0 0.0
        %1263 = vmatprep.subr.mxu0 0.0
        %1264 = vmatpush1.xpose.msra.mxu0 0.0
        %1265 = vmatprep.subr.mxu0 0.0
        %1266 = vmatpush1.xpose.msra.mxu0 0.0
        %1267 = vmatprep.subr.mxu0 0.0
        %1268 = vmatpush1.xpose.msra.mxu0 0.0
        %1269 = vmatprep.subr.mxu0 0.0
        %1270 = vmatpush1.xpose.msra.mxu0 0.0
        %1271 = vmatprep.subr.mxu0 0.0
        %1272 = vmatpush1.xpose.msra.mxu0 0.0
        %1273 = vmatprep.subr.mxu0 0.0
        %1274 = vmatpush1.xpose.msra.mxu0 0.0
        %1275 = vmatprep.subr.mxu0 0.0
        %1276 = vmatpush1.xpose.msra.mxu0 0.0
        %1277 = vmatprep.subr.mxu0 0.0
        %1278 = vmatpush1.xpose.msra.mxu0 0.0
        %1279 = vmatprep.subr.mxu0 0.0
        %1280 = vmatpush1.xpose.msra.mxu0 0.0
        %1281 = vmatprep.subr.mxu0 0.0
        %1282 = vmatpush1.xpose.msra.mxu0 0.0
        %1283 = vmatprep.subr.mxu0 0.0
        %1284 = vmatpush1.xpose.msra.mxu0 0.0
        %1285 = vmatprep.subr.mxu0 0.0
        %1286 = vmatpush1.xpose.msra.mxu0 0.0
        %1287 = vmatprep.subr.mxu0 0.0
        %1288 = vmatpush1.xpose.msra.mxu0 0.0
        %1289 = vmatprep.subr.mxu0 0.0
        %1290 = vmatpush1.xpose.msra.mxu0 0.0
        %1291 = vmatprep.subr.mxu0 0.0
        %1292 = vmatpush1.xpose.msra.mxu0 0.0
        %1293 = vmatprep.subr.mxu0 0.0
        %1294 = vmatpush1.xpose.msra.mxu0 0.0
        %1295 = vmatprep.subr.mxu0 0.0
        %1296 = vmatpush1.xpose.msra.mxu0 0.0
        %1297 = vmatprep.subr.mxu0 0.0
        %1298 = vmatpush1.xpose.msra.mxu0 0.0
        %1299 = vmatprep.subr.mxu0 0.0
        %1300 = vmatpush1.xpose.msra.mxu0 0.0
        %1301 = vmatprep.subr.mxu0 0.0
        %1302 = vmatpush1.xpose.msra.mxu0 0.0
        %1303 = vmatprep.subr.mxu0 0.0
        %1304 = vmatpush1.xpose.msra.mxu0 0.0
        %1305 = vmatprep.subr.mxu0 0.0
        %1306 = vmatpush1.xpose.msra.mxu0 0.0
        %1307 = vmatprep.subr.mxu0 0.0
        %1308 = vmatpush1.xpose.msra.mxu0 0.0
        %1309 = vmatprep.subr.mxu0 0.0
        %1310 = vmatpush1.xpose.msra.mxu0 0.0
        %1311 = vmatprep.subr.mxu0 0.0
        %1312 = vmatpush1.xpose.msra.mxu0 0.0
        %1313 = vmatprep.subr.mxu0 0.0
        %1314 = vmatpush1.xpose.msra.mxu0 0.0
        %1315 = vmatprep.mubr.f32.mxu0 0.0
        %1316 = vmatmul.mubr.f32.gmra.mrb[0].mxu0 %v1247
        %v1317 = vpop.f32.mrb[0].mxu0
        %v1318 = vadd.f32 0.0, %v1317
        %v1319 = vpop.f32.mrb[0].mxu0
        %1320 = vdwg.mxu0
        %v1321 = vmul.f32 %v1318, 0.35355338
        %v1322 = vsel %vm525, %v1321, -inf
        %1323 = vmax.xlane.f32.xlu0 %v1322
        %v1324 = vpop.xlane.xlu0 %1323
        %v1325 = vsub.f32 %v1321, %v1324
        %v1326 = vmul.f32 %v1325, 1.442695
        %v1327 = vpow.pop %v1326
        %v1328 = vsel %vm525, %v1327, 0.0
        %1329 = vadd.xlane.f32.xlu0 %v1328
        %v1330 = vpop.xlane.xlu0 %1329
        %v1331 = vrcp.pop %v1330
        %v1332 = vmul.f32 %v1327, %v1331
        %1333 = vrot.lane.b32.xlu0 %v519, 40
        %v1334 = vpop.permute.xlu0 %1333
        %v1337 = vsel %vm525, %v1332, 0
        %1339 = vmatprep.subr.mxu0 0.0
        %1340 = vmatpush1.msra.mxu0 %v1334
        %1341 = vmatprep.subr.mxu0 0.0
        %1342 = vmatpush1.msra.mxu0 0.0
        %1343 = vmatprep.subr.mxu0 0.0
        %1344 = vmatpush1.msra.mxu0 0.0
        %1345 = vmatprep.subr.mxu0 0.0
        %1346 = vmatpush1.msra.mxu0 0.0
        %1347 = vmatprep.subr.mxu0 0.0
        %1348 = vmatpush1.msra.mxu0 0.0
        %1349 = vmatprep.subr.mxu0 0.0
        %1350 = vmatpush1.msra.mxu0 0.0
        %1351 = vmatprep.subr.mxu0 0.0
        %1352 = vmatpush1.msra.mxu0 0.0
        %1353 = vmatprep.subr.mxu0 0.0
        %1354 = vmatpush1.msra.mxu0 0.0
        %1355 = vmatprep.subr.mxu0 0.0
        %1356 = vmatpush1.msra.mxu0 0.0
        %1357 = vmatprep.subr.mxu0 0.0
        %1358 = vmatpush1.msra.mxu0 0.0
        %1359 = vmatprep.subr.mxu0 0.0
        %1360 = vmatpush1.msra.mxu0 0.0
        %1361 = vmatprep.subr.mxu0 0.0
        %1362 = vmatpush1.msra.mxu0 0.0
        %1363 = vmatprep.subr.mxu0 0.0
        %1364 = vmatpush1.msra.mxu0 0.0
        %1365 = vmatprep.subr.mxu0 0.0
        %1366 = vmatpush1.msra.mxu0 0.0
        %1367 = vmatprep.subr.mxu0 0.0
        %1368 = vmatpush1.msra.mxu0 0.0
        %1369 = vmatprep.subr.mxu0 0.0
        %1370 = vmatpush1.msra.mxu0 0.0
        %1371 = vmatprep.subr.mxu0 0.0
        %1372 = vmatpush1.msra.mxu0 0.0
        %1373 = vmatprep.subr.mxu0 0.0
        %1374 = vmatpush1.msra.mxu0 0.0
        %1375 = vmatprep.subr.mxu0 0.0
        %1376 = vmatpush1.msra.mxu0 0.0
        %1377 = vmatprep.subr.mxu0 0.0
        %1378 = vmatpush1.msra.mxu0 0.0
        %1379 = vmatprep.subr.mxu0 0.0
        %1380 = vmatpush1.msra.mxu0 0.0
        %1381 = vmatprep.subr.mxu0 0.0
        %1382 = vmatpush1.msra.mxu0 0.0
        %1383 = vmatprep.subr.mxu0 0.0
        %1384 = vmatpush1.msra.mxu0 0.0
        %1385 = vmatprep.subr.mxu0 0.0
        %1386 = vmatpush1.msra.mxu0 0.0
        %1387 = vmatprep.subr.mxu0 0.0
        %1388 = vmatpush1.msra.mxu0 0.0
        %1389 = vmatprep.subr.mxu0 0.0
        %1390 = vmatpush1.msra.mxu0 0.0
        %1391 = vmatprep.subr.mxu0 0.0
        %1392 = vmatpush1.msra.mxu0 0.0
        %1393 = vmatprep.subr.mxu0 0.0
        %1394 = vmatpush1.msra.mxu0 0.0
        %1395 = vmatprep.subr.mxu0 0.0
        %1396 = vmatpush1.msra.mxu0 0.0
        %1397 = vmatprep.subr.mxu0 0.0
        %1398 = vmatpush1.msra.mxu0 0.0
        %1399 = vmatprep.subr.mxu0 0.0
        %1400 = vmatpush1.msra.mxu0 0.0
        %1401 = vmatprep.subr.mxu0 0.0
        %1402 = vmatpush1.msra.mxu0 0.0
        %1403 = vmatprep.mubr.f32.mxu0 0.0
        %1404 = vmatmul.mubr.f32.gmra.mrb[0].mxu0 %v1337
        %v1405 = vpop.f32.mrb[0].mxu0
        %v1406 = vadd.f32 0.0, %v1405
        %v1407 = vpop.f32.mrb[0].mxu0
        %1408 = vdwg.mxu0
        %v1409 = vld [vmem:[%s3 + $0x18] sm:$0xff]
        %v1411 = vsel %vm525, %v1406, 0
        %1413 = vmatprep.subr.mxu0 0.0
        %1414 = vmatpush1.msra.mxu0 %v1409
        %1415 = vmatprep.subr.mxu0 0.0
        %1416 = vmatpush1.msra.mxu0 0.0
        %1417 = vmatprep.subr.mxu0 0.0
        %1418 = vmatpush1.msra.mxu0 0.0
        %1419 = vmatprep.subr.mxu0 0.0
        %1420 = vmatpush1.msra.mxu0 0.0
        %1421 = vmatprep.subr.mxu0 0.0
        %1422 = vmatpush1.msra.mxu0 0.0
        %1423 = vmatprep.subr.mxu0 0.0
        %1424 = vmatpush1.msra.mxu0 0.0
        %1425 = vmatprep.subr.mxu0 0.0
        %1426 = vmatpush1.msra.mxu0 0.0
        %1427 = vmatprep.subr.mxu0 0.0
        %1428 = vmatpush1.msra.mxu0 0.0
        %1429 = vmatprep.subr.mxu0 0.0
        %1430 = vmatpush1.msra.mxu0 0.0
        %1431 = vmatprep.subr.mxu0 0.0
        %1432 = vmatpush1.msra.mxu0 0.0
        %1433 = vmatprep.subr.mxu0 0.0
        %1434 = vmatpush1.msra.mxu0 0.0
        %1435 = vmatprep.subr.mxu0 0.0
        %1436 = vmatpush1.msra.mxu0 0.0
        %1437 = vmatprep.subr.mxu0 0.0
        %1438 = vmatpush1.msra.mxu0 0.0
        %1439 = vmatprep.subr.mxu0 0.0
        %1440 = vmatpush1.msra.mxu0 0.0
        %1441 = vmatprep.subr.mxu0 0.0
        %1442 = vmatpush1.msra.mxu0 0.0
        %1443 = vmatprep.subr.mxu0 0.0
        %1444 = vmatpush1.msra.mxu0 0.0
        %1445 = vmatprep.subr.mxu0 0.0
        %1446 = vmatpush1.msra.mxu0 0.0
        %1447 = vmatprep.subr.mxu0 0.0
        %1448 = vmatpush1.msra.mxu0 0.0
        %1449 = vmatprep.subr.mxu0 0.0
        %1450 = vmatpush1.msra.mxu0 0.0
        %1451 = vmatprep.subr.mxu0 0.0
        %1452 = vmatpush1.msra.mxu0 0.0
        %1453 = vmatprep.subr.mxu0 0.0
        %1454 = vmatpush1.msra.mxu0 0.0
        %1455 = vmatprep.subr.mxu0 0.0
        %1456 = vmatpush1.msra.mxu0 0.0
        %1457 = vmatprep.subr.mxu0 0.0
        %1458 = vmatpush1.msra.mxu0 0.0
        %1459 = vmatprep.subr.mxu0 0.0
        %1460 = vmatpush1.msra.mxu0 0.0
        %1461 = vmatprep.subr.mxu0 0.0
        %1462 = vmatpush1.msra.mxu0 0.0
        %1463 = vmatprep.subr.mxu0 0.0
        %1464 = vmatpush1.msra.mxu0 0.0
        %1465 = vmatprep.subr.mxu0 0.0
        %1466 = vmatpush1.msra.mxu0 0.0
        %1467 = vmatprep.subr.mxu0 0.0
        %1468 = vmatpush1.msra.mxu0 0.0
        %1469 = vmatprep.subr.mxu0 0.0
        %1470 = vmatpush1.msra.mxu0 0.0
        %1471 = vmatprep.subr.mxu0 0.0
        %1472 = vmatpush1.msra.mxu0 0.0
        %1473 = vmatprep.subr.mxu0 0.0
        %1474 = vmatpush1.msra.mxu0 0.0
        %1475 = vmatprep.subr.mxu0 0.0
        %1476 = vmatpush1.msra.mxu0 0.0
        %1477 = vmatprep.mubr.f32.mxu0 0.0
        %1478 = vmatmul.mubr.f32.gmra.mrb[0].mxu0 %v1411
        %v1479 = vpop.f32.mrb[0].mxu0
        %v1480 = vadd.f32 0.0, %v1479
        %v1481 = vpop.f32.mrb[0].mxu0
        %1482 = vdwg.mxu0
        %v1483 = vadd.f32 %v1242, %v1480
        %v1484 = vld [vmem:[%s4] sm:$0x1]
        %v1486 = vlaneseq
        %v1487 = vshrl.u32 %v1486, 7
        %v1488 = vsub.s32 0, %v1487
        %v1489 = vrot.slane %v1484, %v1488
        %v1491 = vadd.f32 %v1483, %v1489
        %v1492 = vadd.f32 %v1491, %v436
        %v1493 = vsel %vm448, %v1492, 0.0
        %1494 = vadd.xlane.f32.xlu0 %v1493
        %v1495 = vpop.xlane.xlu0 %1494
        %v1496 = vrcp.pop 32.0
        %v1497 = vmul.f32 %v1495, %v1496
        %v1498 = vsub.f32 %v1492, %v1497
        %v1499 = vmul.f32 %v1498, %v1498
        %v1500 = vsel %vm448, %v1499, 0.0
        %1501 = vadd.xlane.f32.xlu0 %v1500
        %v1502 = vpop.xlane.xlu0 %1501
        %v1503 = vmul.f32 %v1502, %v1496
        %v1504 = vadd.f32 %v1503, 1e-05
        %v1505 = vrsqrt.pop %v1504
        %v1506 = vmul.f32 %v1498, %v1505
        %v1507 = vld [vmem:[%s5] sm:$0x1]
        %v1509 = vlaneseq
        %v1510 = vshrl.u32 %v1509, 7
        %v1511 = vsub.s32 0, %v1510
        %v1512 = vrot.slane %v1507, %v1511
        %v1514 = vmul.f32 %v1506, %v1512
        %v1515 = vld [vmem:[%s6] sm:$0x1]
        %v1517 = vlaneseq
        %v1518 = vshrl.u32 %v1517, 7
        %v1519 = vsub.s32 0, %v1518
        %v1520 = vrot.slane %v1515, %v1519
        %v1522 = vadd.f32 %v1514, %v1520
        %v1523 = vld [vmem:[%s7] sm:$0xff]
        %v1524 = vld [vmem:[%s7 + $0x8] sm:$0xff]
        %v1525 = vld [vmem:[%s7 + $0x10] sm:$0xff]
        %v1526 = vld [vmem:[%s7 + $0x18] sm:$0xff]
        %v1527 = vld [vmem:[%s7 + $0x20] sm:$0xff]
        %v1528 = vld [vmem:[%s7 + $0x28] sm:$0xff]
        %v1529 = vld [vmem:[%s7 + $0x30] sm:$0xff]
        %v1530 = vld [vmem:[%s7 + $0x38] sm:$0xff]
        %v1531 = vld [vmem:[%s8] sm:$0x3]
        %v1533 = vlaneseq
        %v1534 = vshrl.u32 %v1533, 7
        %v1535 = vsub.s32 0, %v1534
        %v1536 = vrot.slane %v1531, %v1535
        %v1537 = vlaneseq
        %v1538 = vshrl.u32 %v1537, 7
        %v1539 = vsub.s32 1, %v1538
        %v1540 = vrot.slane %v1531, %v1539
        %v1544 = vsel %vm448, %v1522, 0
        %1546 = vmatprep.subr.mxu0 %v1524
        %1547 = vmatpush1.msra.mxu0 %v1523
        %1548 = vmatprep.subr.mxu0 %v1526
        %1549 = vmatpush1.msra.mxu0 %v1525
        %1550 = vmatprep.subr.mxu0 %v1528
        %1551 = vmatpush1.msra.mxu0 %v1527
        %1552 = vmatprep.subr.mxu0 %v1530
        %1553 = vmatpush1.msra.mxu0 %v1529
        %1554 = vmatprep.subr.mxu0 0.0
        %1555 = vmatpush1.msra.mxu0 0.0
        %1556 = vmatprep.subr.mxu0 0.0
        %1557 = vmatpush1.msra.mxu0 0.0
        %1558 = vmatprep.subr.mxu0 0.0
        %1559 = vmatpush1.msra.mxu0 0.0
        %1560 = vmatprep.subr.mxu0 0.0
        %1561 = vmatpush1.msra.mxu0 0.0
        %1562 = vmatprep.subr.mxu0 0.0
        %1563 = vmatpush1.msra.mxu0 0.0
        %1564 = vmatprep.subr.mxu0 0.0
        %1565 = vmatpush1.msra.mxu0 0.0
        %1566 = vmatprep.subr.mxu0 0.0
        %1567 = vmatpush1.msra.mxu0 0.0
        %1568 = vmatprep.subr.mxu0 0.0
        %1569 = vmatpush1.msra.mxu0 0.0
        %1570 = vmatprep.subr.mxu0 0.0
        %1571 = vmatpush1.msra.mxu0 0.0
        %1572 = vmatprep.subr.mxu0 0.0
        %1573 = vmatpush1.msra.mxu0 0.0
        %1574 = vmatprep.subr.mxu0 0.0
        %1575 = vmatpush1.msra.mxu0 0.0
        %1576 = vmatprep.subr.mxu0 0.0
        %1577 = vmatpush1.msra.mxu0 0.0
        %1578 = vmatprep.subr.mxu0 0.0
        %1579 = vmatpush1.msra.mxu0 0.0
        %1580 = vmatprep.subr.mxu0 0.0
        %1581 = vmatpush1.msra.mxu0 0.0
        %1582 = vmatprep.subr.mxu0 0.0
        %1583 = vmatpush1.msra.mxu0 0.0
        %1584 = vmatprep.subr.mxu0 0.0
        %1585 = vmatpush1.msra.mxu0 0.0
        %1586 = vmatprep.subr.mxu0 0.0
        %1587 = vmatpush1.msra.mxu0 0.0
        %1588 = vmatprep.subr.mxu0 0.0
        %1589 = vmatpush1.msra.mxu0 0.0
        %1590 = vmatprep.subr.mxu0 0.0
        %1591 = vmatpush1.msra.mxu0 0.0
        %1592 = vmatprep.subr.mxu0 0.0
        %1593 = vmatpush1.msra.mxu0 0.0
        %1594 = vmatprep.subr.mxu0 0.0
        %1595 = vmatpush1.msra.mxu0 0.0
        %1596 = vmatprep.subr.mxu0 0.0
        %1597 = vmatpush1.msra.mxu0 0.0
        %1598 = vmatprep.subr.mxu0 0.0
        %1599 = vmatpush1.msra.mxu0 0.0
        %1600 = vmatprep.subr.mxu0 0.0
        %1601 = vmatpush1.msra.mxu0 0.0
        %1602 = vmatprep.subr.mxu0 0.0
        %1603 = vmatpush1.msra.mxu0 0.0
        %1604 = vmatprep.subr.mxu0 0.0
        %1605 = vmatpush1.msra.mxu0 0.0
        %1606 = vmatprep.subr.mxu0 0.0
        %1607 = vmatpush1.msra.mxu0 0.0
        %1608 = vmatprep.subr.mxu0 0.0
        %1609 = vmatpush1.msra.mxu0 0.0
        %1610 = vmatprep.mubr.f32.mxu0 0.0
        %1611 = vmatmul.mubr.f32.gmra.mrb[0].mxu0 %v1544
        %v1612 = vpop.f32.mrb[0].mxu0
        %v1613 = vadd.f32 %v1536, %v1612
        %v1614 = vpop.f32.mrb[0].mxu0
        %v1615 = vadd.f32 %v1540, %v1614
        %1616 = vdwg.mxu0
        %v1617 = vmax.f32 %v1613, 0.0
        %v1618 = vld [vmem:[%s9] sm:$0xff]
        %v1619 = vld [vmem:[%s9 + $0x8] sm:$0xff]
        %v1620 = vld [vmem:[%s9 + $0x10] sm:$0xff]
        %v1621 = vld [vmem:[%s9 + $0x18] sm:$0xff]
        %v1622 = vld [vmem:[%s9 + $0x20] sm:$0xff]
        %v1623 = vld [vmem:[%s9 + $0x28] sm:$0xff]
        %v1624 = vld [vmem:[%s9 + $0x30] sm:$0xff]
        %v1625 = vld [vmem:[%s9 + $0x38] sm:$0xff]
        %v1626 = vld [vmem:[%s9 + $0x40] sm:$0xff]
        %v1627 = vld [vmem:[%s9 + $0x48] sm:$0xff]
        %v1628 = vld [vmem:[%s9 + $0x50] sm:$0xff]
        %v1629 = vld [vmem:[%s9 + $0x58] sm:$0xff]
        %v1630 = vld [vmem:[%s9 + $0x60] sm:$0xff]
        %v1631 = vld [vmem:[%s9 + $0x68] sm:$0xff]
        %v1632 = vld [vmem:[%s9 + $0x70] sm:$0xff]
        %v1633 = vld [vmem:[%s9 + $0x78] sm:$0xff]
        %v1634 = vld [vmem:[%s10] sm:$0x1]
        %v1636 = vlaneseq
        %v1637 = vshrl.u32 %v1636, 7
        %v1638 = vsub.s32 0, %v1637
        %v1639 = vrot.slane %v1634, %v1638
        %1641 = vmatprep.subr.mxu0 0.0
        %1642 = vmatpush1.msra.mxu0 %v1618
        %1643 = vmatprep.subr.mxu0 0.0
        %1644 = vmatpush1.msra.mxu0 %v1619
        %1645 = vmatprep.subr.mxu0 0.0
        %1646 = vmatpush1.msra.mxu0 %v1620
        %1647 = vmatprep.subr.mxu0 0.0
        %1648 = vmatpush1.msra.mxu0 %v1621
        %1649 = vmatprep.subr.mxu0 0.0
        %1650 = vmatpush1.msra.mxu0 %v1622
        %1651 = vmatprep.subr.mxu0 0.0
        %1652 = vmatpush1.msra.mxu0 %v1623
        %1653 = vmatprep.subr.mxu0 0.0
        %1654 = vmatpush1.msra.mxu0 %v1624
        %1655 = vmatprep.subr.mxu0 0.0
        %1656 = vmatpush1.msra.mxu0 %v1625
        %1657 = vmatprep.subr.mxu0 0.0
        %1658 = vmatpush1.msra.mxu0 %v1626
        %1659 = vmatprep.subr.mxu0 0.0
        %1660 = vmatpush1.msra.mxu0 %v1627
        %1661 = vmatprep.subr.mxu0 0.0
        %1662 = vmatpush1.msra.mxu0 %v1628
        %1663 = vmatprep.subr.mxu0 0.0
        %1664 = vmatpush1.msra.mxu0 %v1629
        %1665 = vmatprep.subr.mxu0 0.0
        %1666 = vmatpush1.msra.mxu0 %v1630
        %1667 = vmatprep.subr.mxu0 0.0
        %1668 = vmatpush1.msra.mxu0 %v1631
        %1669 = vmatprep.subr.mxu0 0.0
        %1670 = vmatpush1.msra.mxu0 %v1632
        %1671 = vmatprep.subr.mxu0 0.0
        %1672 = vmatpush1.msra.mxu0 %v1633
        %1673 = vmatprep.subr.mxu0 0.0
        %1674 = vmatpush1.msra.mxu0 0.0
        %1675 = vmatprep.subr.mxu0 0.0
        %1676 = vmatpush1.msra.mxu0 0.0
        %1677 = vmatprep.subr.mxu0 0.0
        %1678 = vmatpush1.msra.mxu0 0.0
        %1679 = vmatprep.subr.mxu0 0.0
        %1680 = vmatpush1.msra.mxu0 0.0
        %1681 = vmatprep.subr.mxu0 0.0
        %1682 = vmatpush1.msra.mxu0 0.0
        %1683 = vmatprep.subr.mxu0 0.0
        %1684 = vmatpush1.msra.mxu0 0.0
        %1685 = vmatprep.subr.mxu0 0.0
        %1686 = vmatpush1.msra.mxu0 0.0
        %1687 = vmatprep.subr.mxu0 0.0
        %1688 = vmatpush1.msra.mxu0 0.0
        %1689 = vmatprep.subr.mxu0 0.0
        %1690 = vmatpush1.msra.mxu0 0.0
        %1691 = vmatprep.subr.mxu0 0.0
        %1692 = vmatpush1.msra.mxu0 0.0
        %1693 = vmatprep.subr.mxu0 0.0
        %1694 = vmatpush1.msra.mxu0 0.0
        %1695 = vmatprep.subr.mxu0 0.0
        %1696 = vmatpush1.msra.mxu0 0.0
        %1697 = vmatprep.subr.mxu0 0.0
        %1698 = vmatpush1.msra.mxu0 0.0
        %1699 = vmatprep.subr.mxu0 0.0
        %1700 = vmatpush1.msra.mxu0 0.0
        %1701 = vmatprep.subr.mxu0 0.0
        %1702 = vmatpush1.msra.mxu0 0.0
        %1703 = vmatprep.subr.mxu0 0.0
        %1704 = vmatpush1.msra.mxu0 0.0
        %1705 = vmatprep.mubr.f32.mxu0 0.0
        %1706 = vmatmul.mubr.f32.gmra.mrb[0].mxu0 %v1617
        %v1707 = vpop.f32.mrb[0].mxu0
        %v1708 = vadd.f32 %v1639, %v1707
        %v1709 = vpop.f32.mrb[0].mxu0
        %1710 = vdwg.mxu0
        %v1711 = vadd.f32 %v1708, %v1615
        %vm1712 = vcmask 523264
        %v1713 = vsel %vm1712, %v1711, 0.0
        %1714 = vadd.xlane.f32.xlu0 %v1713
        %v1715 = vpop.xlane.xlu0 %1714
        %v1716 = vrcp.pop 64.0
        %v1717 = vmul.f32 %v1715, %v1716
        %v1718 = vsub.f32 %v1711, %v1717
        %v1719 = vmul.f32 %v1718, %v1718
        %v1720 = vsel %vm1712, %v1719, 0.0
        %1721 = vadd.xlane.f32.xlu0 %v1720
        %v1722 = vpop.xlane.xlu0 %1721
        %v1723 = vmul.f32 %v1722, %v1716
        %v1724 = vadd.f32 %v1723, 1e-05
        %v1725 = vrsqrt.pop %v1724
        %v1726 = vmul.f32 %v1718, %v1725
        %v1727 = vld [vmem:[%s11] sm:$0x1]
        %v1729 = vlaneseq
        %v1730 = vshrl.u32 %v1729, 7
        %v1731 = vsub.s32 0, %v1730
        %v1732 = vrot.slane %v1727, %v1731
        %v1734 = vmul.f32 %v1726, %v1732
        %v1735 = vld [vmem:[%s12] sm:$0x1]
        %v1737 = vlaneseq
        %v1738 = vshrl.u32 %v1737, 7
        %v1739 = vsub.s32 0, %v1738
        %v1740 = vrot.slane %v1735, %v1739
        %v1742 = vadd.f32 %v1734, %v1740
        %1743 = vst.msk [vmem:[%s431] sm:$0xff] %vm1712, %v1742
        %s1744 = sand.u32 %s313, 1
        %s1745 = scalar_lea.sflag [#allocation3], %s1744
        %s1746 = sand.u32 %s313, 1
        %s1747 = smul.addr %s1746, 8
        %s1748 = scalar_lea.vmem [#allocation2], %s1747
        // Predicated region
        $region73: #{tpu_custom_call.1} parent=71 // pred_check
          %p1749 = pneg %p323
        $region74: #{tpu_custom_call.1} parent=71 // pred_check_branch
          %1751 = sbr.rel (%p1749) target = $region76
        $region75: #{tpu_custom_call.1} parent=71 // pred_region
          %s1753 = ssub.s32 128, 128
          %1754 = vsyncadd %s1745, %s1753
          %s1755 = smul.addr %s27, 128
          %s1756 = scalar_lea.hbm %s13, %s1755
          %s1758 = sshll.u32 %s1748, 4
          %s1759 = int_to_ptr.vmem [resolvable:$true] %s1758
          %1761 = dma.vmem_to_hbm [thread:$0]  %s1759, 128, %s1756, %s1745
        $region76: #{tpu_custom_call.1} parent=71 // pred_fallthru
          _
      $region72: #{tpu_custom_call.1} parent=5 // pred_fallthru
        _
      %p1762 = scmp.le.s32.totalorder 2, %s22
      // Predicated region
      $region77: #{tpu_custom_call.1} parent=5 // pred_check
        %p1763 = pneg %p1762
      $region78: #{tpu_custom_call.1} parent=5 // pred_check_branch
        %1765 = sbr.rel (%p1763) target = $region80
      $region79: #{tpu_custom_call.1} parent=5 // pred_region
        %s1766 = ssub.s32 %s22, 2
        // Predicated region
        $region81: #{tpu_custom_call.1} parent=79 // pred_check
          %p1767 = pneg %p329
        $region82: #{tpu_custom_call.1} parent=79 // pred_check_branch
          %1769 = sbr.rel (%p1767) target = $region84
        $region83: #{tpu_custom_call.1} parent=79 // pred_region
          %s1770 = sand.u32 %s314, 1
          %s1771 = scalar_lea.sflag [#allocation3], %s1770
          %s1772 = sand.u32 %s314, 1
          %s1773 = smul.addr %s1772, 8
          %s1774 = scalar_lea.vmem [#allocation2], %s1773
          %1775 = dma.done %s1771, 128
        $region84: #{tpu_custom_call.1} parent=79 // pred_fallthru
          _
      $region80: #{tpu_custom_call.1} parent=5 // pred_fallthru
        _
    $region6: #{tpu_custom_call.1} parent=1 // loop_footer
      %s26 = sadd.s32 1, %s22
    $region7: #{tpu_custom_call.1} parent=1 // loop_footer_branch
      %21 = sbr.rel target = $region3
    $region8: #{tpu_custom_call.1} parent=1 // loop_exit
      _
    %1776 = vsyncpa [#allocation3], 1
    %s1777 = scalar_lea.sflag [#allocation3], 1
    %1778 = vsyncpa %s1777, 1

</llo_original>
